<compile_context>
chip_gen: v5e
topology: v5e:2x2
jax: 0.10.0
libtpu: 0.0.40
codegen_flags: <defaults>
</compile_context>

<pallas_src>
import math

import jax
import jax.numpy as jnp
from jax.experimental import pallas as pl
from jax.experimental.pallas import tpu as pltpu


# ----------------------------- the fused kernel -----------------------------

def _encoder_kernel(x_ref, vecs_ref, mats_ref, o_ref):
    # x_ref: (1, T, C) f32   vecs_ref: (NV, 1, C) f32   mats_ref: (NM, C, C) bf16
    # o_ref: (1, 1, C) f32
    counters = {"v": 0, "m": 0}

    def vec():                       # next per-channel vector, shape (1, C), f32
        i = counters["v"]; counters["v"] += 1
        return vecs_ref[i]

    def mat():                       # next (C, C) matrix (in, out), already bf16
        i = counters["m"]; counters["m"] += 1
        return mats_ref[i]

    def cdot(a, w):                  # channel-mixing matmul on the MXU (bf16 in, f32 acc)
        return jnp.dot(a.astype(jnp.bfloat16), w, preferred_element_type=jnp.float32)

    def tdot(sel, a):                # exact time-selection / pooling matmul, kept in f32
        return jnp.dot(sel, a, preferred_element_type=jnp.float32)

    def sel_iotas(t_out, t_in):      # row/col index grids for selection matrices
        r = jax.lax.broadcasted_iota(jnp.int32, (t_out, t_in), 0)
        c = jax.lax.broadcasted_iota(jnp.int32, (t_out, t_in), 1)
        return r, c

    def conv3(h, taps, stride, iotas=None):
        # Conv1d(kernel=3, padding=1, stride=stride, bias=False) on (T, C)
        t_in = h.shape[0]
        t_out = t_in // stride
        if iotas is None:
            iotas = sel_iotas(t_out, t_in)
        r, c = iotas
        out = None
        for k in range(3):
            if stride == 1 and k == 1:
                shifted = h                                   # identity selection
            else:
                sel = (c == stride * r + (k - 1)).astype(jnp.float32)
                shifted = tdot(sel, h)                        # h[stride*t + k - 1], zero padded
            term = cdot(shifted, taps[k])
            out = term if out is None else out + term
        return out

    def se_gate(h, w1, b1, w2, b2):
        # SEBlock: sigmoid(conv_se2(relu(conv_se1(avg_pool(h))))) * h
        pooled = jnp.mean(h, axis=0, keepdims=True)           # AdaptiveAvgPool1d(1) -> (1, C)
        g = jnp.maximum(cdot(pooled, w1) + b1, 0.0)
        z = cdot(g, w2) + b2
        gate = 1.0 / (1.0 + jnp.exp(-z))                      # sigmoid (exp on EUP)
        return h * gate

    def se_basic_block(h, stride):
        # Param read order MUST match the packing order in init_params().
        bn1_s, bn1_b = vec(), vec()
        w1 = (mat(), mat(), mat())
        bn2_s, bn2_b = vec(), vec()
        w2 = (mat(), mat(), mat())
        se_w1, se_b1 = mat(), vec()
        se_w2, se_b2 = mat(), vec()

        if stride == 2:
            ds_w, ds_b = mat(), vec()                         # BN already folded into these
            t_in = h.shape[0]; t_out = t_in // 2
            iotas = sel_iotas(t_out, t_in)                    # shared with conv2 below
            r, c = iotas
            # identity = foldedBN(Conv1x1(AvgPool1d(kernel=2, stride=2)(h)))
            pool = 0.5 * jnp.logical_or(c == 2 * r, c == 2 * r + 1).astype(jnp.float32)
            identity = cdot(tdot(pool, h), ds_w) + ds_b
        else:
            iotas = None
            identity = h                                      # in_c == out_c, stride 1

        t = jnp.maximum(h * bn1_s + bn1_b, 0.0)               # act(bn1(x))  (BN folded)
        t = conv3(t, w1, stride=1)                            # conv1 (always stride 1)
        t = jnp.maximum(t * bn2_s + bn2_b, 0.0)               # act(bn2(.))
        t = conv3(t, w2, stride=stride, iotas=iotas)          # conv2 (stride 1 or 2)
        t = se_gate(t, se_w1, se_b1, se_w2, se_b2)            # SE (in_c == out_c)
        return t + identity

    h = x_ref[0].astype(jnp.float32)                          # (T, C)
    for stride in (1, 2, 1, 2):                               # TemporalBlock x 2
        h = se_basic_block(h, stride)
    o_ref[0] = h[h.shape[0] - 1:, :]                          # feat[..., -1]


# ----------------------------- parameter packing -----------------------------

def init_params(key, hidden_dim, eps=1e-5):
    """All weights packed into two stacked arrays:
         vecs (NV, 1, C) float32   — folded-BN scale/shift and biases
         mats (NM, C, C) bfloat16  — conv taps / SE / downsample matrices (in, out)
    The append order below mirrors the sequential vec()/mat() reads in the kernel."""
    C = hidden_dim
    keys = iter(jax.random.split(key, 128))
    vec_list, mat_list = [], []

    def u_vec(bound):
        return jax.random.uniform(next(keys), (1, C), jnp.float32, -bound, bound)

    def u_mat(fan_in):
        b = 1.0 / math.sqrt(fan_in)
        return jax.random.uniform(next(keys), (C, C), jnp.float32, -b, b)

    def folded_bn():
        gamma = jax.random.uniform(next(keys), (1, C), jnp.float32, 0.5, 1.5)
        beta = jax.random.uniform(next(keys), (1, C), jnp.float32, -0.1, 0.1)
        mean = jax.random.uniform(next(keys), (1, C), jnp.float32, -0.1, 0.1)
        var = jax.random.uniform(next(keys), (1, C), jnp.float32, 0.5, 1.5)
        scale = gamma * jax.lax.rsqrt(var + eps)
        shift = beta - mean * scale
        return scale, shift

    def add_se_basic_block(stride):
        s, t = folded_bn(); vec_list.extend([s, t])                   # bn1 (folded)
        mat_list.extend([u_mat(3 * C) for _ in range(3)])             # conv1 taps (in, out)
        s, t = folded_bn(); vec_list.extend([s, t])                   # bn2 (folded)
        mat_list.extend([u_mat(3 * C) for _ in range(3)])             # conv2 taps
        mat_list.append(u_mat(C)); vec_list.append(u_vec(1.0 / math.sqrt(C)))  # SE conv_se1 w, b
        mat_list.append(u_mat(C)); vec_list.append(u_vec(1.0 / math.sqrt(C)))  # SE conv_se2 w, b
        if stride == 2:
            w = u_mat(C)                                              # downsample 1x1 conv w
            b = u_vec(1.0 / math.sqrt(C))                             # downsample conv bias
            bs, bt = folded_bn()                                      # downsample BN (folded)
            mat_list.append(w * bs)                                   # fold BN scale into conv cols
            vec_list.append(b * bs + bt)                              # fold BN shift into bias

    for stride in (1, 2, 1, 2):
        add_se_basic_block(stride)

    vecs = jnp.stack(vec_list, axis=0)                                # (26, 1, C) f32
    mats = jnp.stack(mat_list, axis=0).astype(jnp.bfloat16)          # (34, C, C) bf16
    return vecs, mats


# ----------------------------- wrapper -----------------------------

def h_agent_temporal_encoder(feat, vecs, mats):
    """feat: (B, hidden_dim, T) as in the torch module; returns (B, hidden_dim)."""
    B, C, T = feat.shape
    assert T % 4 == 0, "two stride-2 stages require T divisible by 4"
    x = jnp.transpose(feat, (0, 2, 1))           # (B, T, C): channels on the lane axis
    nv, nm = vecs.shape[0], mats.shape[0]
    out = pl.pallas_call(
        _encoder_kernel,
        out_shape=jax.ShapeDtypeStruct((B, 1, C), jnp.float32),
        grid_spec=pltpu.PrefetchScalarGridSpec(
            num_scalar_prefetch=0,
            grid=(B,),
            in_specs=[
                pl.BlockSpec((1, T, C), lambda b: (b, 0, 0)),     # per-batch activation tile
                pl.BlockSpec((nv, 1, C), lambda b: (0, 0, 0)),    # all per-channel vectors (f32)
                pl.BlockSpec((nm, C, C), lambda b: (0, 0, 0)),    # all (C, C) matrices (bf16)
            ],
            out_specs=pl.BlockSpec((1, 1, C), lambda b: (b, 0, 0)),
        ),
        compiler_params=pltpu.CompilerParams(
            dimension_semantics=("parallel",),       # shard the batch grid across TensorCores
            vmem_limit_bytes=32 * 1024 * 1024,
        ),
    )(x, vecs, mats)
    return out.reshape(B, C)


# ----------------------------- driver -----------------------------

if __name__ == "__main__":
    HIDDEN_DIM = 32     # args.hidden_dim
    BATCH = 2           # number of agents
    T = 16              # temporal length (kernel_size_dic[0])

    key = jax.random.PRNGKey(0)
    k_params, k_feat = jax.random.split(key)
    vecs, mats = init_params(k_params, HIDDEN_DIM)
    feat = jax.random.normal(k_feat, (BATCH, HIDDEN_DIM, T), jnp.float32)   # (B, C, T)

    out = jax.jit(h_agent_temporal_encoder)(feat, vecs, mats)
    out = jax.block_until_ready(out)

    assert out.shape == (BATCH, HIDDEN_DIM)
    assert bool(jnp.all(jnp.isfinite(out)))
    print("KERNEL_OK")
</pallas_src>

<mosaic_0001>
module attributes {stable_mosaic.version = 11 : i64} {
  func.func @_encoder_kernel(%arg0: i32, %arg1: memref<1x16x32xf32, #tpu.memory_space<vmem>>, %arg2: memref<26x1x32xf32, #tpu.memory_space<vmem>>, %arg3: memref<34x32x32xbf16, #tpu.memory_space<vmem>>, %arg4: memref<1x1x32xf32, #tpu.memory_space<vmem>>) attributes {dimension_semantics = [#tpu.dimension_semantics<parallel>], iteration_bounds = array<i64: 2>, scalar_prefetch = 0 : i64, scratch_operands = 0 : i64, tpu.core_type = #tpu.core_type<tc>, window_params = [{transform_indices = @transform_0, window_bounds = array<i64: 1, 16, 32>}, {pipeline_mode = #tpu.pipeline_mode<synchronous>, transform_indices = @transform_1, window_bounds = array<i64: 26, 1, 32>}, {pipeline_mode = #tpu.pipeline_mode<synchronous>, transform_indices = @transform_2, window_bounds = array<i64: 34, 32, 32>}, {transform_indices = @transform_3, window_bounds = array<i64: 1, 1, 32>}]} {
    %c0 = arith.constant 0 : index
    %c0_0 = arith.constant 0 : index
    %c0_1 = arith.constant 0 : index
    %0 = vector.load %arg1[%c0, %c0_0, %c0_1] : memref<1x16x32xf32, #tpu.memory_space<vmem>>, vector<1x16x32xf32>
    %1 = vector.shape_cast %0 : vector<1x16x32xf32> to vector<16x32xf32>
    %c0_2 = arith.constant 0 : index
    %c0_3 = arith.constant 0 : index
    %c0_4 = arith.constant 0 : index
    %2 = vector.load %arg2[%c0_2, %c0_3, %c0_4] : memref<26x1x32xf32, #tpu.memory_space<vmem>>, vector<1x1x32xf32>
    %3 = vector.shape_cast %2 : vector<1x1x32xf32> to vector<1x32xf32>
    %c1 = arith.constant 1 : index
    %c0_5 = arith.constant 0 : index
    %c0_6 = arith.constant 0 : index
    %4 = vector.load %arg2[%c1, %c0_5, %c0_6] : memref<26x1x32xf32, #tpu.memory_space<vmem>>, vector<1x1x32xf32>
    %5 = vector.shape_cast %4 : vector<1x1x32xf32> to vector<1x32xf32>
    %c0_7 = arith.constant 0 : index
    %c0_8 = arith.constant 0 : index
    %c0_9 = arith.constant 0 : index
    %6 = vector.load %arg3[%c0_7, %c0_8, %c0_9] : memref<34x32x32xbf16, #tpu.memory_space<vmem>>, vector<1x32x32xbf16>
    %7 = vector.shape_cast %6 : vector<1x32x32xbf16> to vector<32x32xbf16>
    %c1_10 = arith.constant 1 : index
    %c0_11 = arith.constant 0 : index
    %c0_12 = arith.constant 0 : index
    %8 = vector.load %arg3[%c1_10, %c0_11, %c0_12] : memref<34x32x32xbf16, #tpu.memory_space<vmem>>, vector<1x32x32xbf16>
    %9 = vector.shape_cast %8 : vector<1x32x32xbf16> to vector<32x32xbf16>
    %c2 = arith.constant 2 : index
    %c0_13 = arith.constant 0 : index
    %c0_14 = arith.constant 0 : index
    %10 = vector.load %arg3[%c2, %c0_13, %c0_14] : memref<34x32x32xbf16, #tpu.memory_space<vmem>>, vector<1x32x32xbf16>
    %11 = vector.shape_cast %10 : vector<1x32x32xbf16> to vector<32x32xbf16>
    %c2_15 = arith.constant 2 : index
    %c0_16 = arith.constant 0 : index
    %c0_17 = arith.constant 0 : index
    %12 = vector.load %arg2[%c2_15, %c0_16, %c0_17] : memref<26x1x32xf32, #tpu.memory_space<vmem>>, vector<1x1x32xf32>
    %13 = vector.shape_cast %12 : vector<1x1x32xf32> to vector<1x32xf32>
    %c3 = arith.constant 3 : index
    %c0_18 = arith.constant 0 : index
    %c0_19 = arith.constant 0 : index
    %14 = vector.load %arg2[%c3, %c0_18, %c0_19] : memref<26x1x32xf32, #tpu.memory_space<vmem>>, vector<1x1x32xf32>
    %15 = vector.shape_cast %14 : vector<1x1x32xf32> to vector<1x32xf32>
    %c3_20 = arith.constant 3 : index
    %c0_21 = arith.constant 0 : index
    %c0_22 = arith.constant 0 : index
    %16 = vector.load %arg3[%c3_20, %c0_21, %c0_22] : memref<34x32x32xbf16, #tpu.memory_space<vmem>>, vector<1x32x32xbf16>
    %17 = vector.shape_cast %16 : vector<1x32x32xbf16> to vector<32x32xbf16>
    %c4 = arith.constant 4 : index
    %c0_23 = arith.constant 0 : index
    %c0_24 = arith.constant 0 : index
    %18 = vector.load %arg3[%c4, %c0_23, %c0_24] : memref<34x32x32xbf16, #tpu.memory_space<vmem>>, vector<1x32x32xbf16>
    %19 = vector.shape_cast %18 : vector<1x32x32xbf16> to vector<32x32xbf16>
    %c5 = arith.constant 5 : index
    %c0_25 = arith.constant 0 : index
    %c0_26 = arith.constant 0 : index
    %20 = vector.load %arg3[%c5, %c0_25, %c0_26] : memref<34x32x32xbf16, #tpu.memory_space<vmem>>, vector<1x32x32xbf16>
    %21 = vector.shape_cast %20 : vector<1x32x32xbf16> to vector<32x32xbf16>
    %c6 = arith.constant 6 : index
    %c0_27 = arith.constant 0 : index
    %c0_28 = arith.constant 0 : index
    %22 = vector.load %arg3[%c6, %c0_27, %c0_28] : memref<34x32x32xbf16, #tpu.memory_space<vmem>>, vector<1x32x32xbf16>
    %23 = vector.shape_cast %22 : vector<1x32x32xbf16> to vector<32x32xbf16>
    %c4_29 = arith.constant 4 : index
    %c0_30 = arith.constant 0 : index
    %c0_31 = arith.constant 0 : index
    %24 = vector.load %arg2[%c4_29, %c0_30, %c0_31] : memref<26x1x32xf32, #tpu.memory_space<vmem>>, vector<1x1x32xf32>
    %25 = vector.shape_cast %24 : vector<1x1x32xf32> to vector<1x32xf32>
    %c7 = arith.constant 7 : index
    %c0_32 = arith.constant 0 : index
    %c0_33 = arith.constant 0 : index
    %26 = vector.load %arg3[%c7, %c0_32, %c0_33] : memref<34x32x32xbf16, #tpu.memory_space<vmem>>, vector<1x32x32xbf16>
    %27 = vector.shape_cast %26 : vector<1x32x32xbf16> to vector<32x32xbf16>
    %c5_34 = arith.constant 5 : index
    %c0_35 = arith.constant 0 : index
    %c0_36 = arith.constant 0 : index
    %28 = vector.load %arg2[%c5_34, %c0_35, %c0_36] : memref<26x1x32xf32, #tpu.memory_space<vmem>>, vector<1x1x32xf32>
    %29 = vector.shape_cast %28 : vector<1x1x32xf32> to vector<1x32xf32>
    %30 = vector.broadcast %3 : vector<1x32xf32> to vector<16x32xf32>
    %31 = arith.mulf %1, %30 : vector<16x32xf32>
    %32 = vector.broadcast %5 : vector<1x32xf32> to vector<16x32xf32>
    %33 = arith.addf %31, %32 : vector<16x32xf32>
    %cst = arith.constant 0.000000e+00 : f32
    %34 = vector.broadcast %cst : f32 to vector<16x32xf32>
    %35 = arith.maximumf %33, %34 : vector<16x32xf32>
    %36 = tpu.iota {dimensions = array<i32: 0>} : vector<16x16xi32>
    %37 = tpu.iota {dimensions = array<i32: 1>} : vector<16x16xi32>
    %c1_i32 = arith.constant 1 : i32
    %38 = vector.broadcast %c1_i32 : i32 to vector<16x16xi32>
    %39 = arith.muli %38, %36 : vector<16x16xi32>
    %c-1_i32 = arith.constant -1 : i32
    %40 = vector.broadcast %c-1_i32 : i32 to vector<16x16xi32>
    %41 = arith.addi %39, %40 : vector<16x16xi32>
    %42 = arith.cmpi eq, %37, %41 : vector<16x16xi32>
    %43 = arith.extui %42 : vector<16x16xi1> to vector<16x16xi32>
    %44 = arith.sitofp %43 : vector<16x16xi32> to vector<16x16xf32>
    %cst_37 = arith.constant dense<0.000000e+00> : vector<16x32xf32>
    %45 = tpu.matmul %44, %35, %cst_37 {dimension_numbers = #tpu.dot_dimension_numbers<[1], [0], [0], [1], [0, 0, 1, 1], [], []>} : vector<16x16xf32>, vector<16x32xf32>, vector<16x32xf32> -> vector<16x32xf32>
    %46 = arith.truncf %45 : vector<16x32xf32> to vector<16x32xbf16>
    %cst_38 = arith.constant dense<0.000000e+00> : vector<16x32xf32>
    %47 = tpu.matmul %46, %7, %cst_38 {dimension_numbers = #tpu.dot_dimension_numbers<[1], [0], [0], [1], [0, 0, 1, 1], [], []>} : vector<16x32xbf16>, vector<32x32xbf16>, vector<16x32xf32> -> vector<16x32xf32>
    %48 = arith.truncf %35 : vector<16x32xf32> to vector<16x32xbf16>
    %cst_39 = arith.constant dense<0.000000e+00> : vector<16x32xf32>
    %49 = tpu.matmul %48, %9, %cst_39 {dimension_numbers = #tpu.dot_dimension_numbers<[1], [0], [0], [1], [0, 0, 1, 1], [], []>} : vector<16x32xbf16>, vector<32x32xbf16>, vector<16x32xf32> -> vector<16x32xf32>
    %50 = arith.addf %47, %49 : vector<16x32xf32>
    %c1_i32_40 = arith.constant 1 : i32
    %51 = vector.broadcast %c1_i32_40 : i32 to vector<16x16xi32>
    %52 = arith.muli %51, %36 : vector<16x16xi32>
    %c1_i32_41 = arith.constant 1 : i32
    %53 = vector.broadcast %c1_i32_41 : i32 to vector<16x16xi32>
    %54 = arith.addi %52, %53 : vector<16x16xi32>
    %55 = arith.cmpi eq, %37, %54 : vector<16x16xi32>
    %56 = arith.extui %55 : vector<16x16xi1> to vector<16x16xi32>
    %57 = arith.sitofp %56 : vector<16x16xi32> to vector<16x16xf32>
    %cst_42 = arith.constant dense<0.000000e+00> : vector<16x32xf32>
    %58 = tpu.matmul %57, %35, %cst_42 {dimension_numbers = #tpu.dot_dimension_numbers<[1], [0], [0], [1], [0, 0, 1, 1], [], []>} : vector<16x16xf32>, vector<16x32xf32>, vector<16x32xf32> -> vector<16x32xf32>
    %59 = arith.truncf %58 : vector<16x32xf32> to vector<16x32xbf16>
    %cst_43 = arith.constant dense<0.000000e+00> : vector<16x32xf32>
    %60 = tpu.matmul %59, %11, %cst_43 {dimension_numbers = #tpu.dot_dimension_numbers<[1], [0], [0], [1], [0, 0, 1, 1], [], []>} : vector<16x32xbf16>, vector<32x32xbf16>, vector<16x32xf32> -> vector<16x32xf32>
    %61 = arith.addf %50, %60 : vector<16x32xf32>
    %62 = vector.broadcast %13 : vector<1x32xf32> to vector<16x32xf32>
    %63 = arith.mulf %61, %62 : vector<16x32xf32>
    %64 = vector.broadcast %15 : vector<1x32xf32> to vector<16x32xf32>
    %65 = arith.addf %63, %64 : vector<16x32xf32>
    %cst_44 = arith.constant 0.000000e+00 : f32
    %66 = vector.broadcast %cst_44 : f32 to vector<16x32xf32>
    %67 = arith.maximumf %65, %66 : vector<16x32xf32>
    %68 = tpu.iota {dimensions = array<i32: 0>} : vector<16x16xi32>
    %69 = tpu.iota {dimensions = array<i32: 1>} : vector<16x16xi32>
    %c1_i32_45 = arith.constant 1 : i32
    %70 = vector.broadcast %c1_i32_45 : i32 to vector<16x16xi32>
    %71 = arith.muli %70, %68 : vector<16x16xi32>
    %c-1_i32_46 = arith.constant -1 : i32
    %72 = vector.broadcast %c-1_i32_46 : i32 to vector<16x16xi32>
    %73 = arith.addi %71, %72 : vector<16x16xi32>
    %74 = arith.cmpi eq, %69, %73 : vector<16x16xi32>
    %75 = arith.extui %74 : vector<16x16xi1> to vector<16x16xi32>
    %76 = arith.sitofp %75 : vector<16x16xi32> to vector<16x16xf32>
    %cst_47 = arith.constant dense<0.000000e+00> : vector<16x32xf32>
    %77 = tpu.matmul %76, %67, %cst_47 {dimension_numbers = #tpu.dot_dimension_numbers<[1], [0], [0], [1], [0, 0, 1, 1], [], []>} : vector<16x16xf32>, vector<16x32xf32>, vector<16x32xf32> -> vector<16x32xf32>
    %78 = arith.truncf %77 : vector<16x32xf32> to vector<16x32xbf16>
    %cst_48 = arith.constant dense<0.000000e+00> : vector<16x32xf32>
    %79 = tpu.matmul %78, %17, %cst_48 {dimension_numbers = #tpu.dot_dimension_numbers<[1], [0], [0], [1], [0, 0, 1, 1], [], []>} : vector<16x32xbf16>, vector<32x32xbf16>, vector<16x32xf32> -> vector<16x32xf32>
    %80 = arith.truncf %67 : vector<16x32xf32> to vector<16x32xbf16>
    %cst_49 = arith.constant dense<0.000000e+00> : vector<16x32xf32>
    %81 = tpu.matmul %80, %19, %cst_49 {dimension_numbers = #tpu.dot_dimension_numbers<[1], [0], [0], [1], [0, 0, 1, 1], [], []>} : vector<16x32xbf16>, vector<32x32xbf16>, vector<16x32xf32> -> vector<16x32xf32>
    %82 = arith.addf %79, %81 : vector<16x32xf32>
    %c1_i32_50 = arith.constant 1 : i32
    %83 = vector.broadcast %c1_i32_50 : i32 to vector<16x16xi32>
    %84 = arith.muli %83, %68 : vector<16x16xi32>
    %c1_i32_51 = arith.constant 1 : i32
    %85 = vector.broadcast %c1_i32_51 : i32 to vector<16x16xi32>
    %86 = arith.addi %84, %85 : vector<16x16xi32>
    %87 = arith.cmpi eq, %69, %86 : vector<16x16xi32>
    %88 = arith.extui %87 : vector<16x16xi1> to vector<16x16xi32>
    %89 = arith.sitofp %88 : vector<16x16xi32> to vector<16x16xf32>
    %cst_52 = arith.constant dense<0.000000e+00> : vector<16x32xf32>
    %90 = tpu.matmul %89, %67, %cst_52 {dimension_numbers = #tpu.dot_dimension_numbers<[1], [0], [0], [1], [0, 0, 1, 1], [], []>} : vector<16x16xf32>, vector<16x32xf32>, vector<16x32xf32> -> vector<16x32xf32>
    %91 = arith.truncf %90 : vector<16x32xf32> to vector<16x32xbf16>
    %cst_53 = arith.constant dense<0.000000e+00> : vector<16x32xf32>
    %92 = tpu.matmul %91, %21, %cst_53 {dimension_numbers = #tpu.dot_dimension_numbers<[1], [0], [0], [1], [0, 0, 1, 1], [], []>} : vector<16x32xbf16>, vector<32x32xbf16>, vector<16x32xf32> -> vector<16x32xf32>
    %93 = arith.addf %82, %92 : vector<16x32xf32>
    %cst_54 = arith.constant dense<0.000000e+00> : vector<32xf32>
    %94 = vector.multi_reduction <add>, %93, %cst_54 [0] : vector<16x32xf32> to vector<32xf32>
    %95 = vector.shape_cast %94 : vector<32xf32> to vector<1x32xf32>
    %cst_55 = arith.constant 1.600000e+01 : f32
    %96 = vector.broadcast %cst_55 : f32 to vector<1x32xf32>
    %97 = arith.divf %95, %96 : vector<1x32xf32>
    %98 = arith.truncf %97 : vector<1x32xf32> to vector<1x32xbf16>
    %cst_56 = arith.constant dense<0.000000e+00> : vector<1x32xf32>
    %99 = tpu.matmul %98, %23, %cst_56 {dimension_numbers = #tpu.dot_dimension_numbers<[1], [0], [0], [1], [0, 0, 1, 1], [], []>} : vector<1x32xbf16>, vector<32x32xbf16>, vector<1x32xf32> -> vector<1x32xf32>
    %100 = arith.addf %99, %25 : vector<1x32xf32>
    %cst_57 = arith.constant 0.000000e+00 : f32
    %101 = vector.broadcast %cst_57 : f32 to vector<1x32xf32>
    %102 = arith.maximumf %100, %101 : vector<1x32xf32>
    %103 = arith.truncf %102 : vector<1x32xf32> to vector<1x32xbf16>
    %cst_58 = arith.constant dense<0.000000e+00> : vector<1x32xf32>
    %104 = tpu.matmul %103, %27, %cst_58 {dimension_numbers = #tpu.dot_dimension_numbers<[1], [0], [0], [1], [0, 0, 1, 1], [], []>} : vector<1x32xbf16>, vector<32x32xbf16>, vector<1x32xf32> -> vector<1x32xf32>
    %105 = arith.addf %104, %29 : vector<1x32xf32>
    %cst_59 = arith.constant 0.000000e+00 : f32
    %106 = vector.broadcast %cst_59 : f32 to vector<1x32xf32>
    %107 = arith.subf %106, %105 : vector<1x32xf32>
    %108 = math.exp %107 : vector<1x32xf32>
    %cst_60 = arith.constant 1.000000e+00 : f32
    %109 = vector.broadcast %cst_60 : f32 to vector<1x32xf32>
    %110 = arith.addf %109, %108 : vector<1x32xf32>
    %cst_61 = arith.constant 1.000000e+00 : f32
    %111 = vector.broadcast %cst_61 : f32 to vector<1x32xf32>
    %112 = arith.divf %111, %110 : vector<1x32xf32>
    %113 = vector.broadcast %112 : vector<1x32xf32> to vector<16x32xf32>
    %114 = arith.mulf %93, %113 : vector<16x32xf32>
    %115 = arith.addf %114, %1 : vector<16x32xf32>
    %c6_62 = arith.constant 6 : index
    %c0_63 = arith.constant 0 : index
    %c0_64 = arith.constant 0 : index
    %116 = vector.load %arg2[%c6_62, %c0_63, %c0_64] : memref<26x1x32xf32, #tpu.memory_space<vmem>>, vector<1x1x32xf32>
    %117 = vector.shape_cast %116 : vector<1x1x32xf32> to vector<1x32xf32>
    %c7_65 = arith.constant 7 : index
    %c0_66 = arith.constant 0 : index
    %c0_67 = arith.constant 0 : index
    %118 = vector.load %arg2[%c7_65, %c0_66, %c0_67] : memref<26x1x32xf32, #tpu.memory_space<vmem>>, vector<1x1x32xf32>
    %119 = vector.shape_cast %118 : vector<1x1x32xf32> to vector<1x32xf32>
    %c8 = arith.constant 8 : index
    %c0_68 = arith.constant 0 : index
    %c0_69 = arith.constant 0 : index
    %120 = vector.load %arg3[%c8, %c0_68, %c0_69] : memref<34x32x32xbf16, #tpu.memory_space<vmem>>, vector<1x32x32xbf16>
    %121 = vector.shape_cast %120 : vector<1x32x32xbf16> to vector<32x32xbf16>
    %c9 = arith.constant 9 : index
    %c0_70 = arith.constant 0 : index
    %c0_71 = arith.constant 0 : index
    %122 = vector.load %arg3[%c9, %c0_70, %c0_71] : memref<34x32x32xbf16, #tpu.memory_space<vmem>>, vector<1x32x32xbf16>
    %123 = vector.shape_cast %122 : vector<1x32x32xbf16> to vector<32x32xbf16>
    %c10 = arith.constant 10 : index
    %c0_72 = arith.constant 0 : index
    %c0_73 = arith.constant 0 : index
    %124 = vector.load %arg3[%c10, %c0_72, %c0_73] : memref<34x32x32xbf16, #tpu.memory_space<vmem>>, vector<1x32x32xbf16>
    %125 = vector.shape_cast %124 : vector<1x32x32xbf16> to vector<32x32xbf16>
    %c8_74 = arith.constant 8 : index
    %c0_75 = arith.constant 0 : index
    %c0_76 = arith.constant 0 : index
    %126 = vector.load %arg2[%c8_74, %c0_75, %c0_76] : memref<26x1x32xf32, #tpu.memory_space<vmem>>, vector<1x1x32xf32>
    %127 = vector.shape_cast %126 : vector<1x1x32xf32> to vector<1x32xf32>
    %c9_77 = arith.constant 9 : index
    %c0_78 = arith.constant 0 : index
    %c0_79 = arith.constant 0 : index
    %128 = vector.load %arg2[%c9_77, %c0_78, %c0_79] : memref<26x1x32xf32, #tpu.memory_space<vmem>>, vector<1x1x32xf32>
    %129 = vector.shape_cast %128 : vector<1x1x32xf32> to vector<1x32xf32>
    %c11 = arith.constant 11 : index
    %c0_80 = arith.constant 0 : index
    %c0_81 = arith.constant 0 : index
    %130 = vector.load %arg3[%c11, %c0_80, %c0_81] : memref<34x32x32xbf16, #tpu.memory_space<vmem>>, vector<1x32x32xbf16>
    %131 = vector.shape_cast %130 : vector<1x32x32xbf16> to vector<32x32xbf16>
    %c12 = arith.constant 12 : index
    %c0_82 = arith.constant 0 : index
    %c0_83 = arith.constant 0 : index
    %132 = vector.load %arg3[%c12, %c0_82, %c0_83] : memref<34x32x32xbf16, #tpu.memory_space<vmem>>, vector<1x32x32xbf16>
    %133 = vector.shape_cast %132 : vector<1x32x32xbf16> to vector<32x32xbf16>
    %c13 = arith.constant 13 : index
    %c0_84 = arith.constant 0 : index
    %c0_85 = arith.constant 0 : index
    %134 = vector.load %arg3[%c13, %c0_84, %c0_85] : memref<34x32x32xbf16, #tpu.memory_space<vmem>>, vector<1x32x32xbf16>
    %135 = vector.shape_cast %134 : vector<1x32x32xbf16> to vector<32x32xbf16>
    %c14 = arith.constant 14 : index
    %c0_86 = arith.constant 0 : index
    %c0_87 = arith.constant 0 : index
    %136 = vector.load %arg3[%c14, %c0_86, %c0_87] : memref<34x32x32xbf16, #tpu.memory_space<vmem>>, vector<1x32x32xbf16>
    %137 = vector.shape_cast %136 : vector<1x32x32xbf16> to vector<32x32xbf16>
    %c10_88 = arith.constant 10 : index
    %c0_89 = arith.constant 0 : index
    %c0_90 = arith.constant 0 : index
    %138 = vector.load %arg2[%c10_88, %c0_89, %c0_90] : memref<26x1x32xf32, #tpu.memory_space<vmem>>, vector<1x1x32xf32>
    %139 = vector.shape_cast %138 : vector<1x1x32xf32> to vector<1x32xf32>
    %c15 = arith.constant 15 : index
    %c0_91 = arith.constant 0 : index
    %c0_92 = arith.constant 0 : index
    %140 = vector.load %arg3[%c15, %c0_91, %c0_92] : memref<34x32x32xbf16, #tpu.memory_space<vmem>>, vector<1x32x32xbf16>
    %141 = vector.shape_cast %140 : vector<1x32x32xbf16> to vector<32x32xbf16>
    %c11_93 = arith.constant 11 : index
    %c0_94 = arith.constant 0 : index
    %c0_95 = arith.constant 0 : index
    %142 = vector.load %arg2[%c11_93, %c0_94, %c0_95] : memref<26x1x32xf32, #tpu.memory_space<vmem>>, vector<1x1x32xf32>
    %143 = vector.shape_cast %142 : vector<1x1x32xf32> to vector<1x32xf32>
    %c16 = arith.constant 16 : index
    %c0_96 = arith.constant 0 : index
    %c0_97 = arith.constant 0 : index
    %144 = vector.load %arg3[%c16, %c0_96, %c0_97] : memref<34x32x32xbf16, #tpu.memory_space<vmem>>, vector<1x32x32xbf16>
    %145 = vector.shape_cast %144 : vector<1x32x32xbf16> to vector<32x32xbf16>
    %c12_98 = arith.constant 12 : index
    %c0_99 = arith.constant 0 : index
    %c0_100 = arith.constant 0 : index
    %146 = vector.load %arg2[%c12_98, %c0_99, %c0_100] : memref<26x1x32xf32, #tpu.memory_space<vmem>>, vector<1x1x32xf32>
    %147 = vector.shape_cast %146 : vector<1x1x32xf32> to vector<1x32xf32>
    %148 = tpu.iota {dimensions = array<i32: 0>} : vector<8x16xi32>
    %149 = tpu.iota {dimensions = array<i32: 1>} : vector<8x16xi32>
    %c2_i32 = arith.constant 2 : i32
    %150 = vector.broadcast %c2_i32 : i32 to vector<8x16xi32>
    %151 = arith.muli %150, %148 : vector<8x16xi32>
    %152 = arith.cmpi eq, %149, %151 : vector<8x16xi32>
    %c2_i32_101 = arith.constant 2 : i32
    %153 = vector.broadcast %c2_i32_101 : i32 to vector<8x16xi32>
    %154 = arith.muli %153, %148 : vector<8x16xi32>
    %c1_i32_102 = arith.constant 1 : i32
    %155 = vector.broadcast %c1_i32_102 : i32 to vector<8x16xi32>
    %156 = arith.addi %154, %155 : vector<8x16xi32>
    %157 = arith.cmpi eq, %149, %156 : vector<8x16xi32>
    %158 = arith.ori %152, %157 : vector<8x16xi1>
    %159 = arith.extui %158 : vector<8x16xi1> to vector<8x16xi32>
    %160 = arith.sitofp %159 : vector<8x16xi32> to vector<8x16xf32>
    %cst_103 = arith.constant 5.000000e-01 : f32
    %161 = vector.broadcast %cst_103 : f32 to vector<8x16xf32>
    %162 = arith.mulf %161, %160 : vector<8x16xf32>
    %cst_104 = arith.constant dense<0.000000e+00> : vector<8x32xf32>
    %163 = tpu.matmul %162, %115, %cst_104 {dimension_numbers = #tpu.dot_dimension_numbers<[1], [0], [0], [1], [0, 0, 1, 1], [], []>} : vector<8x16xf32>, vector<16x32xf32>, vector<8x32xf32> -> vector<8x32xf32>
    %164 = arith.truncf %163 : vector<8x32xf32> to vector<8x32xbf16>
    %cst_105 = arith.constant dense<0.000000e+00> : vector<8x32xf32>
    %165 = tpu.matmul %164, %145, %cst_105 {dimension_numbers = #tpu.dot_dimension_numbers<[1], [0], [0], [1], [0, 0, 1, 1], [], []>} : vector<8x32xbf16>, vector<32x32xbf16>, vector<8x32xf32> -> vector<8x32xf32>
    %166 = vector.broadcast %147 : vector<1x32xf32> to vector<8x32xf32>
    %167 = arith.addf %165, %166 : vector<8x32xf32>
    %168 = vector.broadcast %117 : vector<1x32xf32> to vector<16x32xf32>
    %169 = arith.mulf %115, %168 : vector<16x32xf32>
    %170 = vector.broadcast %119 : vector<1x32xf32> to vector<16x32xf32>
    %171 = arith.addf %169, %170 : vector<16x32xf32>
    %cst_106 = arith.constant 0.000000e+00 : f32
    %172 = vector.broadcast %cst_106 : f32 to vector<16x32xf32>
    %173 = arith.maximumf %171, %172 : vector<16x32xf32>
    %174 = tpu.iota {dimensions = array<i32: 0>} : vector<16x16xi32>
    %175 = tpu.iota {dimensions = array<i32: 1>} : vector<16x16xi32>
    %c1_i32_107 = arith.constant 1 : i32
    %176 = vector.broadcast %c1_i32_107 : i32 to vector<16x16xi32>
    %177 = arith.muli %176, %174 : vector<16x16xi32>
    %c-1_i32_108 = arith.constant -1 : i32
    %178 = vector.broadcast %c-1_i32_108 : i32 to vector<16x16xi32>
    %179 = arith.addi %177, %178 : vector<16x16xi32>
    %180 = arith.cmpi eq, %175, %179 : vector<16x16xi32>
    %181 = arith.extui %180 : vector<16x16xi1> to vector<16x16xi32>
    %182 = arith.sitofp %181 : vector<16x16xi32> to vector<16x16xf32>
    %cst_109 = arith.constant dense<0.000000e+00> : vector<16x32xf32>
    %183 = tpu.matmul %182, %173, %cst_109 {dimension_numbers = #tpu.dot_dimension_numbers<[1], [0], [0], [1], [0, 0, 1, 1], [], []>} : vector<16x16xf32>, vector<16x32xf32>, vector<16x32xf32> -> vector<16x32xf32>
    %184 = arith.truncf %183 : vector<16x32xf32> to vector<16x32xbf16>
    %cst_110 = arith.constant dense<0.000000e+00> : vector<16x32xf32>
    %185 = tpu.matmul %184, %121, %cst_110 {dimension_numbers = #tpu.dot_dimension_numbers<[1], [0], [0], [1], [0, 0, 1, 1], [], []>} : vector<16x32xbf16>, vector<32x32xbf16>, vector<16x32xf32> -> vector<16x32xf32>
    %186 = arith.truncf %173 : vector<16x32xf32> to vector<16x32xbf16>
    %cst_111 = arith.constant dense<0.000000e+00> : vector<16x32xf32>
    %187 = tpu.matmul %186, %123, %cst_111 {dimension_numbers = #tpu.dot_dimension_numbers<[1], [0], [0], [1], [0, 0, 1, 1], [], []>} : vector<16x32xbf16>, vector<32x32xbf16>, vector<16x32xf32> -> vector<16x32xf32>
    %188 = arith.addf %185, %187 : vector<16x32xf32>
    %c1_i32_112 = arith.constant 1 : i32
    %189 = vector.broadcast %c1_i32_112 : i32 to vector<16x16xi32>
    %190 = arith.muli %189, %174 : vector<16x16xi32>
    %c1_i32_113 = arith.constant 1 : i32
    %191 = vector.broadcast %c1_i32_113 : i32 to vector<16x16xi32>
    %192 = arith.addi %190, %191 : vector<16x16xi32>
    %193 = arith.cmpi eq, %175, %192 : vector<16x16xi32>
    %194 = arith.extui %193 : vector<16x16xi1> to vector<16x16xi32>
    %195 = arith.sitofp %194 : vector<16x16xi32> to vector<16x16xf32>
    %cst_114 = arith.constant dense<0.000000e+00> : vector<16x32xf32>
    %196 = tpu.matmul %195, %173, %cst_114 {dimension_numbers = #tpu.dot_dimension_numbers<[1], [0], [0], [1], [0, 0, 1, 1], [], []>} : vector<16x16xf32>, vector<16x32xf32>, vector<16x32xf32> -> vector<16x32xf32>
    %197 = arith.truncf %196 : vector<16x32xf32> to vector<16x32xbf16>
    %cst_115 = arith.constant dense<0.000000e+00> : vector<16x32xf32>
    %198 = tpu.matmul %197, %125, %cst_115 {dimension_numbers = #tpu.dot_dimension_numbers<[1], [0], [0], [1], [0, 0, 1, 1], [], []>} : vector<16x32xbf16>, vector<32x32xbf16>, vector<16x32xf32> -> vector<16x32xf32>
    %199 = arith.addf %188, %198 : vector<16x32xf32>
    %200 = vector.broadcast %127 : vector<1x32xf32> to vector<16x32xf32>
    %201 = arith.mulf %199, %200 : vector<16x32xf32>
    %202 = vector.broadcast %129 : vector<1x32xf32> to vector<16x32xf32>
    %203 = arith.addf %201, %202 : vector<16x32xf32>
    %cst_116 = arith.constant 0.000000e+00 : f32
    %204 = vector.broadcast %cst_116 : f32 to vector<16x32xf32>
    %205 = arith.maximumf %203, %204 : vector<16x32xf32>
    %c2_i32_117 = arith.constant 2 : i32
    %206 = vector.broadcast %c2_i32_117 : i32 to vector<8x16xi32>
    %207 = arith.muli %206, %148 : vector<8x16xi32>
    %c-1_i32_118 = arith.constant -1 : i32
    %208 = vector.broadcast %c-1_i32_118 : i32 to vector<8x16xi32>
    %209 = arith.addi %207, %208 : vector<8x16xi32>
    %210 = arith.cmpi eq, %149, %209 : vector<8x16xi32>
    %211 = arith.extui %210 : vector<8x16xi1> to vector<8x16xi32>
    %212 = arith.sitofp %211 : vector<8x16xi32> to vector<8x16xf32>
    %cst_119 = arith.constant dense<0.000000e+00> : vector<8x32xf32>
    %213 = tpu.matmul %212, %205, %cst_119 {dimension_numbers = #tpu.dot_dimension_numbers<[1], [0], [0], [1], [0, 0, 1, 1], [], []>} : vector<8x16xf32>, vector<16x32xf32>, vector<8x32xf32> -> vector<8x32xf32>
    %214 = arith.truncf %213 : vector<8x32xf32> to vector<8x32xbf16>
    %cst_120 = arith.constant dense<0.000000e+00> : vector<8x32xf32>
    %215 = tpu.matmul %214, %131, %cst_120 {dimension_numbers = #tpu.dot_dimension_numbers<[1], [0], [0], [1], [0, 0, 1, 1], [], []>} : vector<8x32xbf16>, vector<32x32xbf16>, vector<8x32xf32> -> vector<8x32xf32>
    %c2_i32_121 = arith.constant 2 : i32
    %216 = vector.broadcast %c2_i32_121 : i32 to vector<8x16xi32>
    %217 = arith.muli %216, %148 : vector<8x16xi32>
    %c0_i32 = arith.constant 0 : i32
    %218 = vector.broadcast %c0_i32 : i32 to vector<8x16xi32>
    %219 = arith.addi %217, %218 : vector<8x16xi32>
    %220 = arith.cmpi eq, %149, %219 : vector<8x16xi32>
    %221 = arith.extui %220 : vector<8x16xi1> to vector<8x16xi32>
    %222 = arith.sitofp %221 : vector<8x16xi32> to vector<8x16xf32>
    %cst_122 = arith.constant dense<0.000000e+00> : vector<8x32xf32>
    %223 = tpu.matmul %222, %205, %cst_122 {dimension_numbers = #tpu.dot_dimension_numbers<[1], [0], [0], [1], [0, 0, 1, 1], [], []>} : vector<8x16xf32>, vector<16x32xf32>, vector<8x32xf32> -> vector<8x32xf32>
    %224 = arith.truncf %223 : vector<8x32xf32> to vector<8x32xbf16>
    %cst_123 = arith.constant dense<0.000000e+00> : vector<8x32xf32>
    %225 = tpu.matmul %224, %133, %cst_123 {dimension_numbers = #tpu.dot_dimension_numbers<[1], [0], [0], [1], [0, 0, 1, 1], [], []>} : vector<8x32xbf16>, vector<32x32xbf16>, vector<8x32xf32> -> vector<8x32xf32>
    %226 = arith.addf %215, %225 : vector<8x32xf32>
    %c2_i32_124 = arith.constant 2 : i32
    %227 = vector.broadcast %c2_i32_124 : i32 to vector<8x16xi32>
    %228 = arith.muli %227, %148 : vector<8x16xi32>
    %c1_i32_125 = arith.constant 1 : i32
    %229 = vector.broadcast %c1_i32_125 : i32 to vector<8x16xi32>
    %230 = arith.addi %228, %229 : vector<8x16xi32>
    %231 = arith.cmpi eq, %149, %230 : vector<8x16xi32>
    %232 = arith.extui %231 : vector<8x16xi1> to vector<8x16xi32>
    %233 = arith.sitofp %232 : vector<8x16xi32> to vector<8x16xf32>
    %cst_126 = arith.constant dense<0.000000e+00> : vector<8x32xf32>
    %234 = tpu.matmul %233, %205, %cst_126 {dimension_numbers = #tpu.dot_dimension_numbers<[1], [0], [0], [1], [0, 0, 1, 1], [], []>} : vector<8x16xf32>, vector<16x32xf32>, vector<8x32xf32> -> vector<8x32xf32>
    %235 = arith.truncf %234 : vector<8x32xf32> to vector<8x32xbf16>
    %cst_127 = arith.constant dense<0.000000e+00> : vector<8x32xf32>
    %236 = tpu.matmul %235, %135, %cst_127 {dimension_numbers = #tpu.dot_dimension_numbers<[1], [0], [0], [1], [0, 0, 1, 1], [], []>} : vector<8x32xbf16>, vector<32x32xbf16>, vector<8x32xf32> -> vector<8x32xf32>
    %237 = arith.addf %226, %236 : vector<8x32xf32>
    %cst_128 = arith.constant dense<0.000000e+00> : vector<32xf32>
    %238 = vector.multi_reduction <add>, %237, %cst_128 [0] : vector<8x32xf32> to vector<32xf32>
    %239 = vector.shape_cast %238 : vector<32xf32> to vector<1x32xf32>
    %cst_129 = arith.constant 8.000000e+00 : f32
    %240 = vector.broadcast %cst_129 : f32 to vector<1x32xf32>
    %241 = arith.divf %239, %240 : vector<1x32xf32>
    %242 = arith.truncf %241 : vector<1x32xf32> to vector<1x32xbf16>
    %cst_130 = arith.constant dense<0.000000e+00> : vector<1x32xf32>
    %243 = tpu.matmul %242, %137, %cst_130 {dimension_numbers = #tpu.dot_dimension_numbers<[1], [0], [0], [1], [0, 0, 1, 1], [], []>} : vector<1x32xbf16>, vector<32x32xbf16>, vector<1x32xf32> -> vector<1x32xf32>
    %244 = arith.addf %243, %139 : vector<1x32xf32>
    %cst_131 = arith.constant 0.000000e+00 : f32
    %245 = vector.broadcast %cst_131 : f32 to vector<1x32xf32>
    %246 = arith.maximumf %244, %245 : vector<1x32xf32>
    %247 = arith.truncf %246 : vector<1x32xf32> to vector<1x32xbf16>
    %cst_132 = arith.constant dense<0.000000e+00> : vector<1x32xf32>
    %248 = tpu.matmul %247, %141, %cst_132 {dimension_numbers = #tpu.dot_dimension_numbers<[1], [0], [0], [1], [0, 0, 1, 1], [], []>} : vector<1x32xbf16>, vector<32x32xbf16>, vector<1x32xf32> -> vector<1x32xf32>
    %249 = arith.addf %248, %143 : vector<1x32xf32>
    %cst_133 = arith.constant 0.000000e+00 : f32
    %250 = vector.broadcast %cst_133 : f32 to vector<1x32xf32>
    %251 = arith.subf %250, %249 : vector<1x32xf32>
    %252 = math.exp %251 : vector<1x32xf32>
    %cst_134 = arith.constant 1.000000e+00 : f32
    %253 = vector.broadcast %cst_134 : f32 to vector<1x32xf32>
    %254 = arith.addf %253, %252 : vector<1x32xf32>
    %cst_135 = arith.constant 1.000000e+00 : f32
    %255 = vector.broadcast %cst_135 : f32 to vector<1x32xf32>
    %256 = arith.divf %255, %254 : vector<1x32xf32>
    %257 = vector.broadcast %256 : vector<1x32xf32> to vector<8x32xf32>
    %258 = arith.mulf %237, %257 : vector<8x32xf32>
    %259 = arith.addf %258, %167 : vector<8x32xf32>
    %c13_136 = arith.constant 13 : index
    %c0_137 = arith.constant 0 : index
    %c0_138 = arith.constant 0 : index
    %260 = vector.load %arg2[%c13_136, %c0_137, %c0_138] : memref<26x1x32xf32, #tpu.memory_space<vmem>>, vector<1x1x32xf32>
    %261 = vector.shape_cast %260 : vector<1x1x32xf32> to vector<1x32xf32>
    %c14_139 = arith.constant 14 : index
    %c0_140 = arith.constant 0 : index
    %c0_141 = arith.constant 0 : index
    %262 = vector.load %arg2[%c14_139, %c0_140, %c0_141] : memref<26x1x32xf32, #tpu.memory_space<vmem>>, vector<1x1x32xf32>
    %263 = vector.shape_cast %262 : vector<1x1x32xf32> to vector<1x32xf32>
    %c17 = arith.constant 17 : index
    %c0_142 = arith.constant 0 : index
    %c0_143 = arith.constant 0 : index
    %264 = vector.load %arg3[%c17, %c0_142, %c0_143] : memref<34x32x32xbf16, #tpu.memory_space<vmem>>, vector<1x32x32xbf16>
    %265 = vector.shape_cast %264 : vector<1x32x32xbf16> to vector<32x32xbf16>
    %c18 = arith.constant 18 : index
    %c0_144 = arith.constant 0 : index
    %c0_145 = arith.constant 0 : index
    %266 = vector.load %arg3[%c18, %c0_144, %c0_145] : memref<34x32x32xbf16, #tpu.memory_space<vmem>>, vector<1x32x32xbf16>
    %267 = vector.shape_cast %266 : vector<1x32x32xbf16> to vector<32x32xbf16>
    %c19 = arith.constant 19 : index
    %c0_146 = arith.constant 0 : index
    %c0_147 = arith.constant 0 : index
    %268 = vector.load %arg3[%c19, %c0_146, %c0_147] : memref<34x32x32xbf16, #tpu.memory_space<vmem>>, vector<1x32x32xbf16>
    %269 = vector.shape_cast %268 : vector<1x32x32xbf16> to vector<32x32xbf16>
    %c15_148 = arith.constant 15 : index
    %c0_149 = arith.constant 0 : index
    %c0_150 = arith.constant 0 : index
    %270 = vector.load %arg2[%c15_148, %c0_149, %c0_150] : memref<26x1x32xf32, #tpu.memory_space<vmem>>, vector<1x1x32xf32>
    %271 = vector.shape_cast %270 : vector<1x1x32xf32> to vector<1x32xf32>
    %c16_151 = arith.constant 16 : index
    %c0_152 = arith.constant 0 : index
    %c0_153 = arith.constant 0 : index
    %272 = vector.load %arg2[%c16_151, %c0_152, %c0_153] : memref<26x1x32xf32, #tpu.memory_space<vmem>>, vector<1x1x32xf32>
    %273 = vector.shape_cast %272 : vector<1x1x32xf32> to vector<1x32xf32>
    %c20 = arith.constant 20 : index
    %c0_154 = arith.constant 0 : index
    %c0_155 = arith.constant 0 : index
    %274 = vector.load %arg3[%c20, %c0_154, %c0_155] : memref<34x32x32xbf16, #tpu.memory_space<vmem>>, vector<1x32x32xbf16>
    %275 = vector.shape_cast %274 : vector<1x32x32xbf16> to vector<32x32xbf16>
    %c21 = arith.constant 21 : index
    %c0_156 = arith.constant 0 : index
    %c0_157 = arith.constant 0 : index
    %276 = vector.load %arg3[%c21, %c0_156, %c0_157] : memref<34x32x32xbf16, #tpu.memory_space<vmem>>, vector<1x32x32xbf16>
    %277 = vector.shape_cast %276 : vector<1x32x32xbf16> to vector<32x32xbf16>
    %c22 = arith.constant 22 : index
    %c0_158 = arith.constant 0 : index
    %c0_159 = arith.constant 0 : index
    %278 = vector.load %arg3[%c22, %c0_158, %c0_159] : memref<34x32x32xbf16, #tpu.memory_space<vmem>>, vector<1x32x32xbf16>
    %279 = vector.shape_cast %278 : vector<1x32x32xbf16> to vector<32x32xbf16>
    %c23 = arith.constant 23 : index
    %c0_160 = arith.constant 0 : index
    %c0_161 = arith.constant 0 : index
    %280 = vector.load %arg3[%c23, %c0_160, %c0_161] : memref<34x32x32xbf16, #tpu.memory_space<vmem>>, vector<1x32x32xbf16>
    %281 = vector.shape_cast %280 : vector<1x32x32xbf16> to vector<32x32xbf16>
    %c17_162 = arith.constant 17 : index
    %c0_163 = arith.constant 0 : index
    %c0_164 = arith.constant 0 : index
    %282 = vector.load %arg2[%c17_162, %c0_163, %c0_164] : memref<26x1x32xf32, #tpu.memory_space<vmem>>, vector<1x1x32xf32>
    %283 = vector.shape_cast %282 : vector<1x1x32xf32> to vector<1x32xf32>
    %c24 = arith.constant 24 : index
    %c0_165 = arith.constant 0 : index
    %c0_166 = arith.constant 0 : index
    %284 = vector.load %arg3[%c24, %c0_165, %c0_166] : memref<34x32x32xbf16, #tpu.memory_space<vmem>>, vector<1x32x32xbf16>
    %285 = vector.shape_cast %284 : vector<1x32x32xbf16> to vector<32x32xbf16>
    %c18_167 = arith.constant 18 : index
    %c0_168 = arith.constant 0 : index
    %c0_169 = arith.constant 0 : index
    %286 = vector.load %arg2[%c18_167, %c0_168, %c0_169] : memref<26x1x32xf32, #tpu.memory_space<vmem>>, vector<1x1x32xf32>
    %287 = vector.shape_cast %286 : vector<1x1x32xf32> to vector<1x32xf32>
    %288 = vector.broadcast %261 : vector<1x32xf32> to vector<8x32xf32>
    %289 = arith.mulf %259, %288 : vector<8x32xf32>
    %290 = vector.broadcast %263 : vector<1x32xf32> to vector<8x32xf32>
    %291 = arith.addf %289, %290 : vector<8x32xf32>
    %cst_170 = arith.constant 0.000000e+00 : f32
    %292 = vector.broadcast %cst_170 : f32 to vector<8x32xf32>
    %293 = arith.maximumf %291, %292 : vector<8x32xf32>
    %294 = tpu.iota {dimensions = array<i32: 0>} : vector<8x8xi32>
    %295 = tpu.iota {dimensions = array<i32: 1>} : vector<8x8xi32>
    %c1_i32_171 = arith.constant 1 : i32
    %296 = vector.broadcast %c1_i32_171 : i32 to vector<8x8xi32>
    %297 = arith.muli %296, %294 : vector<8x8xi32>
    %c-1_i32_172 = arith.constant -1 : i32
    %298 = vector.broadcast %c-1_i32_172 : i32 to vector<8x8xi32>
    %299 = arith.addi %297, %298 : vector<8x8xi32>
    %300 = arith.cmpi eq, %295, %299 : vector<8x8xi32>
    %301 = arith.extui %300 : vector<8x8xi1> to vector<8x8xi32>
    %302 = arith.sitofp %301 : vector<8x8xi32> to vector<8x8xf32>
    %cst_173 = arith.constant dense<0.000000e+00> : vector<8x32xf32>
    %303 = tpu.matmul %302, %293, %cst_173 {dimension_numbers = #tpu.dot_dimension_numbers<[1], [0], [0], [1], [0, 0, 1, 1], [], []>} : vector<8x8xf32>, vector<8x32xf32>, vector<8x32xf32> -> vector<8x32xf32>
    %304 = arith.truncf %303 : vector<8x32xf32> to vector<8x32xbf16>
    %cst_174 = arith.constant dense<0.000000e+00> : vector<8x32xf32>
    %305 = tpu.matmul %304, %265, %cst_174 {dimension_numbers = #tpu.dot_dimension_numbers<[1], [0], [0], [1], [0, 0, 1, 1], [], []>} : vector<8x32xbf16>, vector<32x32xbf16>, vector<8x32xf32> -> vector<8x32xf32>
    %306 = arith.truncf %293 : vector<8x32xf32> to vector<8x32xbf16>
    %cst_175 = arith.constant dense<0.000000e+00> : vector<8x32xf32>
    %307 = tpu.matmul %306, %267, %cst_175 {dimension_numbers = #tpu.dot_dimension_numbers<[1], [0], [0], [1], [0, 0, 1, 1], [], []>} : vector<8x32xbf16>, vector<32x32xbf16>, vector<8x32xf32> -> vector<8x32xf32>
    %308 = arith.addf %305, %307 : vector<8x32xf32>
    %c1_i32_176 = arith.constant 1 : i32
    %309 = vector.broadcast %c1_i32_176 : i32 to vector<8x8xi32>
    %310 = arith.muli %309, %294 : vector<8x8xi32>
    %c1_i32_177 = arith.constant 1 : i32
    %311 = vector.broadcast %c1_i32_177 : i32 to vector<8x8xi32>
    %312 = arith.addi %310, %311 : vector<8x8xi32>
    %313 = arith.cmpi eq, %295, %312 : vector<8x8xi32>
    %314 = arith.extui %313 : vector<8x8xi1> to vector<8x8xi32>
    %315 = arith.sitofp %314 : vector<8x8xi32> to vector<8x8xf32>
    %cst_178 = arith.constant dense<0.000000e+00> : vector<8x32xf32>
    %316 = tpu.matmul %315, %293, %cst_178 {dimension_numbers = #tpu.dot_dimension_numbers<[1], [0], [0], [1], [0, 0, 1, 1], [], []>} : vector<8x8xf32>, vector<8x32xf32>, vector<8x32xf32> -> vector<8x32xf32>
    %317 = arith.truncf %316 : vector<8x32xf32> to vector<8x32xbf16>
    %cst_179 = arith.constant dense<0.000000e+00> : vector<8x32xf32>
    %318 = tpu.matmul %317, %269, %cst_179 {dimension_numbers = #tpu.dot_dimension_numbers<[1], [0], [0], [1], [0, 0, 1, 1], [], []>} : vector<8x32xbf16>, vector<32x32xbf16>, vector<8x32xf32> -> vector<8x32xf32>
    %319 = arith.addf %308, %318 : vector<8x32xf32>
    %320 = vector.broadcast %271 : vector<1x32xf32> to vector<8x32xf32>
    %321 = arith.mulf %319, %320 : vector<8x32xf32>
    %322 = vector.broadcast %273 : vector<1x32xf32> to vector<8x32xf32>
    %323 = arith.addf %321, %322 : vector<8x32xf32>
    %cst_180 = arith.constant 0.000000e+00 : f32
    %324 = vector.broadcast %cst_180 : f32 to vector<8x32xf32>
    %325 = arith.maximumf %323, %324 : vector<8x32xf32>
    %326 = tpu.iota {dimensions = array<i32: 0>} : vector<8x8xi32>
    %327 = tpu.iota {dimensions = array<i32: 1>} : vector<8x8xi32>
    %c1_i32_181 = arith.constant 1 : i32
    %328 = vector.broadcast %c1_i32_181 : i32 to vector<8x8xi32>
    %329 = arith.muli %328, %326 : vector<8x8xi32>
    %c-1_i32_182 = arith.constant -1 : i32
    %330 = vector.broadcast %c-1_i32_182 : i32 to vector<8x8xi32>
    %331 = arith.addi %329, %330 : vector<8x8xi32>
    %332 = arith.cmpi eq, %327, %331 : vector<8x8xi32>
    %333 = arith.extui %332 : vector<8x8xi1> to vector<8x8xi32>
    %334 = arith.sitofp %333 : vector<8x8xi32> to vector<8x8xf32>
    %cst_183 = arith.constant dense<0.000000e+00> : vector<8x32xf32>
    %335 = tpu.matmul %334, %325, %cst_183 {dimension_numbers = #tpu.dot_dimension_numbers<[1], [0], [0], [1], [0, 0, 1, 1], [], []>} : vector<8x8xf32>, vector<8x32xf32>, vector<8x32xf32> -> vector<8x32xf32>
    %336 = arith.truncf %335 : vector<8x32xf32> to vector<8x32xbf16>
    %cst_184 = arith.constant dense<0.000000e+00> : vector<8x32xf32>
    %337 = tpu.matmul %336, %275, %cst_184 {dimension_numbers = #tpu.dot_dimension_numbers<[1], [0], [0], [1], [0, 0, 1, 1], [], []>} : vector<8x32xbf16>, vector<32x32xbf16>, vector<8x32xf32> -> vector<8x32xf32>
    %338 = arith.truncf %325 : vector<8x32xf32> to vector<8x32xbf16>
    %cst_185 = arith.constant dense<0.000000e+00> : vector<8x32xf32>
    %339 = tpu.matmul %338, %277, %cst_185 {dimension_numbers = #tpu.dot_dimension_numbers<[1], [0], [0], [1], [0, 0, 1, 1], [], []>} : vector<8x32xbf16>, vector<32x32xbf16>, vector<8x32xf32> -> vector<8x32xf32>
    %340 = arith.addf %337, %339 : vector<8x32xf32>
    %c1_i32_186 = arith.constant 1 : i32
    %341 = vector.broadcast %c1_i32_186 : i32 to vector<8x8xi32>
    %342 = arith.muli %341, %326 : vector<8x8xi32>
    %c1_i32_187 = arith.constant 1 : i32
    %343 = vector.broadcast %c1_i32_187 : i32 to vector<8x8xi32>
    %344 = arith.addi %342, %343 : vector<8x8xi32>
    %345 = arith.cmpi eq, %327, %344 : vector<8x8xi32>
    %346 = arith.extui %345 : vector<8x8xi1> to vector<8x8xi32>
    %347 = arith.sitofp %346 : vector<8x8xi32> to vector<8x8xf32>
    %cst_188 = arith.constant dense<0.000000e+00> : vector<8x32xf32>
    %348 = tpu.matmul %347, %325, %cst_188 {dimension_numbers = #tpu.dot_dimension_numbers<[1], [0], [0], [1], [0, 0, 1, 1], [], []>} : vector<8x8xf32>, vector<8x32xf32>, vector<8x32xf32> -> vector<8x32xf32>
    %349 = arith.truncf %348 : vector<8x32xf32> to vector<8x32xbf16>
    %cst_189 = arith.constant dense<0.000000e+00> : vector<8x32xf32>
    %350 = tpu.matmul %349, %279, %cst_189 {dimension_numbers = #tpu.dot_dimension_numbers<[1], [0], [0], [1], [0, 0, 1, 1], [], []>} : vector<8x32xbf16>, vector<32x32xbf16>, vector<8x32xf32> -> vector<8x32xf32>
    %351 = arith.addf %340, %350 : vector<8x32xf32>
    %cst_190 = arith.constant dense<0.000000e+00> : vector<32xf32>
    %352 = vector.multi_reduction <add>, %351, %cst_190 [0] : vector<8x32xf32> to vector<32xf32>
    %353 = vector.shape_cast %352 : vector<32xf32> to vector<1x32xf32>
    %cst_191 = arith.constant 8.000000e+00 : f32
    %354 = vector.broadcast %cst_191 : f32 to vector<1x32xf32>
    %355 = arith.divf %353, %354 : vector<1x32xf32>
    %356 = arith.truncf %355 : vector<1x32xf32> to vector<1x32xbf16>
    %cst_192 = arith.constant dense<0.000000e+00> : vector<1x32xf32>
    %357 = tpu.matmul %356, %281, %cst_192 {dimension_numbers = #tpu.dot_dimension_numbers<[1], [0], [0], [1], [0, 0, 1, 1], [], []>} : vector<1x32xbf16>, vector<32x32xbf16>, vector<1x32xf32> -> vector<1x32xf32>
    %358 = arith.addf %357, %283 : vector<1x32xf32>
    %cst_193 = arith.constant 0.000000e+00 : f32
    %359 = vector.broadcast %cst_193 : f32 to vector<1x32xf32>
    %360 = arith.maximumf %358, %359 : vector<1x32xf32>
    %361 = arith.truncf %360 : vector<1x32xf32> to vector<1x32xbf16>
    %cst_194 = arith.constant dense<0.000000e+00> : vector<1x32xf32>
    %362 = tpu.matmul %361, %285, %cst_194 {dimension_numbers = #tpu.dot_dimension_numbers<[1], [0], [0], [1], [0, 0, 1, 1], [], []>} : vector<1x32xbf16>, vector<32x32xbf16>, vector<1x32xf32> -> vector<1x32xf32>
    %363 = arith.addf %362, %287 : vector<1x32xf32>
    %cst_195 = arith.constant 0.000000e+00 : f32
    %364 = vector.broadcast %cst_195 : f32 to vector<1x32xf32>
    %365 = arith.subf %364, %363 : vector<1x32xf32>
    %366 = math.exp %365 : vector<1x32xf32>
    %cst_196 = arith.constant 1.000000e+00 : f32
    %367 = vector.broadcast %cst_196 : f32 to vector<1x32xf32>
    %368 = arith.addf %367, %366 : vector<1x32xf32>
    %cst_197 = arith.constant 1.000000e+00 : f32
    %369 = vector.broadcast %cst_197 : f32 to vector<1x32xf32>
    %370 = arith.divf %369, %368 : vector<1x32xf32>
    %371 = vector.broadcast %370 : vector<1x32xf32> to vector<8x32xf32>
    %372 = arith.mulf %351, %371 : vector<8x32xf32>
    %373 = arith.addf %372, %259 : vector<8x32xf32>
    %c19_198 = arith.constant 19 : index
    %c0_199 = arith.constant 0 : index
    %c0_200 = arith.constant 0 : index
    %374 = vector.load %arg2[%c19_198, %c0_199, %c0_200] : memref<26x1x32xf32, #tpu.memory_space<vmem>>, vector<1x1x32xf32>
    %375 = vector.shape_cast %374 : vector<1x1x32xf32> to vector<1x32xf32>
    %c20_201 = arith.constant 20 : index
    %c0_202 = arith.constant 0 : index
    %c0_203 = arith.constant 0 : index
    %376 = vector.load %arg2[%c20_201, %c0_202, %c0_203] : memref<26x1x32xf32, #tpu.memory_space<vmem>>, vector<1x1x32xf32>
    %377 = vector.shape_cast %376 : vector<1x1x32xf32> to vector<1x32xf32>
    %c25 = arith.constant 25 : index
    %c0_204 = arith.constant 0 : index
    %c0_205 = arith.constant 0 : index
    %378 = vector.load %arg3[%c25, %c0_204, %c0_205] : memref<34x32x32xbf16, #tpu.memory_space<vmem>>, vector<1x32x32xbf16>
    %379 = vector.shape_cast %378 : vector<1x32x32xbf16> to vector<32x32xbf16>
    %c26 = arith.constant 26 : index
    %c0_206 = arith.constant 0 : index
    %c0_207 = arith.constant 0 : index
    %380 = vector.load %arg3[%c26, %c0_206, %c0_207] : memref<34x32x32xbf16, #tpu.memory_space<vmem>>, vector<1x32x32xbf16>
    %381 = vector.shape_cast %380 : vector<1x32x32xbf16> to vector<32x32xbf16>
    %c27 = arith.constant 27 : index
    %c0_208 = arith.constant 0 : index
    %c0_209 = arith.constant 0 : index
    %382 = vector.load %arg3[%c27, %c0_208, %c0_209] : memref<34x32x32xbf16, #tpu.memory_space<vmem>>, vector<1x32x32xbf16>
    %383 = vector.shape_cast %382 : vector<1x32x32xbf16> to vector<32x32xbf16>
    %c21_210 = arith.constant 21 : index
    %c0_211 = arith.constant 0 : index
    %c0_212 = arith.constant 0 : index
    %384 = vector.load %arg2[%c21_210, %c0_211, %c0_212] : memref<26x1x32xf32, #tpu.memory_space<vmem>>, vector<1x1x32xf32>
    %385 = vector.shape_cast %384 : vector<1x1x32xf32> to vector<1x32xf32>
    %c22_213 = arith.constant 22 : index
    %c0_214 = arith.constant 0 : index
    %c0_215 = arith.constant 0 : index
    %386 = vector.load %arg2[%c22_213, %c0_214, %c0_215] : memref<26x1x32xf32, #tpu.memory_space<vmem>>, vector<1x1x32xf32>
    %387 = vector.shape_cast %386 : vector<1x1x32xf32> to vector<1x32xf32>
    %c28 = arith.constant 28 : index
    %c0_216 = arith.constant 0 : index
    %c0_217 = arith.constant 0 : index
    %388 = vector.load %arg3[%c28, %c0_216, %c0_217] : memref<34x32x32xbf16, #tpu.memory_space<vmem>>, vector<1x32x32xbf16>
    %389 = vector.shape_cast %388 : vector<1x32x32xbf16> to vector<32x32xbf16>
    %c29 = arith.constant 29 : index
    %c0_218 = arith.constant 0 : index
    %c0_219 = arith.constant 0 : index
    %390 = vector.load %arg3[%c29, %c0_218, %c0_219] : memref<34x32x32xbf16, #tpu.memory_space<vmem>>, vector<1x32x32xbf16>
    %391 = vector.shape_cast %390 : vector<1x32x32xbf16> to vector<32x32xbf16>
    %c30 = arith.constant 30 : index
    %c0_220 = arith.constant 0 : index
    %c0_221 = arith.constant 0 : index
    %392 = vector.load %arg3[%c30, %c0_220, %c0_221] : memref<34x32x32xbf16, #tpu.memory_space<vmem>>, vector<1x32x32xbf16>
    %393 = vector.shape_cast %392 : vector<1x32x32xbf16> to vector<32x32xbf16>
    %c31 = arith.constant 31 : index
    %c0_222 = arith.constant 0 : index
    %c0_223 = arith.constant 0 : index
    %394 = vector.load %arg3[%c31, %c0_222, %c0_223] : memref<34x32x32xbf16, #tpu.memory_space<vmem>>, vector<1x32x32xbf16>
    %395 = vector.shape_cast %394 : vector<1x32x32xbf16> to vector<32x32xbf16>
    %c23_224 = arith.constant 23 : index
    %c0_225 = arith.constant 0 : index
    %c0_226 = arith.constant 0 : index
    %396 = vector.load %arg2[%c23_224, %c0_225, %c0_226] : memref<26x1x32xf32, #tpu.memory_space<vmem>>, vector<1x1x32xf32>
    %397 = vector.shape_cast %396 : vector<1x1x32xf32> to vector<1x32xf32>
    %c32 = arith.constant 32 : index
    %c0_227 = arith.constant 0 : index
    %c0_228 = arith.constant 0 : index
    %398 = vector.load %arg3[%c32, %c0_227, %c0_228] : memref<34x32x32xbf16, #tpu.memory_space<vmem>>, vector<1x32x32xbf16>
    %399 = vector.shape_cast %398 : vector<1x32x32xbf16> to vector<32x32xbf16>
    %c24_229 = arith.constant 24 : index
    %c0_230 = arith.constant 0 : index
    %c0_231 = arith.constant 0 : index
    %400 = vector.load %arg2[%c24_229, %c0_230, %c0_231] : memref<26x1x32xf32, #tpu.memory_space<vmem>>, vector<1x1x32xf32>
    %401 = vector.shape_cast %400 : vector<1x1x32xf32> to vector<1x32xf32>
    %c33 = arith.constant 33 : index
    %c0_232 = arith.constant 0 : index
    %c0_233 = arith.constant 0 : index
    %402 = vector.load %arg3[%c33, %c0_232, %c0_233] : memref<34x32x32xbf16, #tpu.memory_space<vmem>>, vector<1x32x32xbf16>
    %403 = vector.shape_cast %402 : vector<1x32x32xbf16> to vector<32x32xbf16>
    %c25_234 = arith.constant 25 : index
    %c0_235 = arith.constant 0 : index
    %c0_236 = arith.constant 0 : index
    %404 = vector.load %arg2[%c25_234, %c0_235, %c0_236] : memref<26x1x32xf32, #tpu.memory_space<vmem>>, vector<1x1x32xf32>
    %405 = vector.shape_cast %404 : vector<1x1x32xf32> to vector<1x32xf32>
    %406 = tpu.iota {dimensions = array<i32: 0>} : vector<4x8xi32>
    %407 = tpu.iota {dimensions = array<i32: 1>} : vector<4x8xi32>
    %c2_i32_237 = arith.constant 2 : i32
    %408 = vector.broadcast %c2_i32_237 : i32 to vector<4x8xi32>
    %409 = arith.muli %408, %406 : vector<4x8xi32>
    %410 = arith.cmpi eq, %407, %409 : vector<4x8xi32>
    %c2_i32_238 = arith.constant 2 : i32
    %411 = vector.broadcast %c2_i32_238 : i32 to vector<4x8xi32>
    %412 = arith.muli %411, %406 : vector<4x8xi32>
    %c1_i32_239 = arith.constant 1 : i32
    %413 = vector.broadcast %c1_i32_239 : i32 to vector<4x8xi32>
    %414 = arith.addi %412, %413 : vector<4x8xi32>
    %415 = arith.cmpi eq, %407, %414 : vector<4x8xi32>
    %416 = arith.ori %410, %415 : vector<4x8xi1>
    %417 = arith.extui %416 : vector<4x8xi1> to vector<4x8xi32>
    %418 = arith.sitofp %417 : vector<4x8xi32> to vector<4x8xf32>
    %cst_240 = arith.constant 5.000000e-01 : f32
    %419 = vector.broadcast %cst_240 : f32 to vector<4x8xf32>
    %420 = arith.mulf %419, %418 : vector<4x8xf32>
    %cst_241 = arith.constant dense<0.000000e+00> : vector<4x32xf32>
    %421 = tpu.matmul %420, %373, %cst_241 {dimension_numbers = #tpu.dot_dimension_numbers<[1], [0], [0], [1], [0, 0, 1, 1], [], []>} : vector<4x8xf32>, vector<8x32xf32>, vector<4x32xf32> -> vector<4x32xf32>
    %422 = arith.truncf %421 : vector<4x32xf32> to vector<4x32xbf16>
    %cst_242 = arith.constant dense<0.000000e+00> : vector<4x32xf32>
    %423 = tpu.matmul %422, %403, %cst_242 {dimension_numbers = #tpu.dot_dimension_numbers<[1], [0], [0], [1], [0, 0, 1, 1], [], []>} : vector<4x32xbf16>, vector<32x32xbf16>, vector<4x32xf32> -> vector<4x32xf32>
    %424 = vector.broadcast %405 : vector<1x32xf32> to vector<4x32xf32>
    %425 = arith.addf %423, %424 : vector<4x32xf32>
    %426 = vector.broadcast %375 : vector<1x32xf32> to vector<8x32xf32>
    %427 = arith.mulf %373, %426 : vector<8x32xf32>
    %428 = vector.broadcast %377 : vector<1x32xf32> to vector<8x32xf32>
    %429 = arith.addf %427, %428 : vector<8x32xf32>
    %cst_243 = arith.constant 0.000000e+00 : f32
    %430 = vector.broadcast %cst_243 : f32 to vector<8x32xf32>
    %431 = arith.maximumf %429, %430 : vector<8x32xf32>
    %432 = tpu.iota {dimensions = array<i32: 0>} : vector<8x8xi32>
    %433 = tpu.iota {dimensions = array<i32: 1>} : vector<8x8xi32>
    %c1_i32_244 = arith.constant 1 : i32
    %434 = vector.broadcast %c1_i32_244 : i32 to vector<8x8xi32>
    %435 = arith.muli %434, %432 : vector<8x8xi32>
    %c-1_i32_245 = arith.constant -1 : i32
    %436 = vector.broadcast %c-1_i32_245 : i32 to vector<8x8xi32>
    %437 = arith.addi %435, %436 : vector<8x8xi32>
    %438 = arith.cmpi eq, %433, %437 : vector<8x8xi32>
    %439 = arith.extui %438 : vector<8x8xi1> to vector<8x8xi32>
    %440 = arith.sitofp %439 : vector<8x8xi32> to vector<8x8xf32>
    %cst_246 = arith.constant dense<0.000000e+00> : vector<8x32xf32>
    %441 = tpu.matmul %440, %431, %cst_246 {dimension_numbers = #tpu.dot_dimension_numbers<[1], [0], [0], [1], [0, 0, 1, 1], [], []>} : vector<8x8xf32>, vector<8x32xf32>, vector<8x32xf32> -> vector<8x32xf32>
    %442 = arith.truncf %441 : vector<8x32xf32> to vector<8x32xbf16>
    %cst_247 = arith.constant dense<0.000000e+00> : vector<8x32xf32>
    %443 = tpu.matmul %442, %379, %cst_247 {dimension_numbers = #tpu.dot_dimension_numbers<[1], [0], [0], [1], [0, 0, 1, 1], [], []>} : vector<8x32xbf16>, vector<32x32xbf16>, vector<8x32xf32> -> vector<8x32xf32>
    %444 = arith.truncf %431 : vector<8x32xf32> to vector<8x32xbf16>
    %cst_248 = arith.constant dense<0.000000e+00> : vector<8x32xf32>
    %445 = tpu.matmul %444, %381, %cst_248 {dimension_numbers = #tpu.dot_dimension_numbers<[1], [0], [0], [1], [0, 0, 1, 1], [], []>} : vector<8x32xbf16>, vector<32x32xbf16>, vector<8x32xf32> -> vector<8x32xf32>
    %446 = arith.addf %443, %445 : vector<8x32xf32>
    %c1_i32_249 = arith.constant 1 : i32
    %447 = vector.broadcast %c1_i32_249 : i32 to vector<8x8xi32>
    %448 = arith.muli %447, %432 : vector<8x8xi32>
    %c1_i32_250 = arith.constant 1 : i32
    %449 = vector.broadcast %c1_i32_250 : i32 to vector<8x8xi32>
    %450 = arith.addi %448, %449 : vector<8x8xi32>
    %451 = arith.cmpi eq, %433, %450 : vector<8x8xi32>
    %452 = arith.extui %451 : vector<8x8xi1> to vector<8x8xi32>
    %453 = arith.sitofp %452 : vector<8x8xi32> to vector<8x8xf32>
    %cst_251 = arith.constant dense<0.000000e+00> : vector<8x32xf32>
    %454 = tpu.matmul %453, %431, %cst_251 {dimension_numbers = #tpu.dot_dimension_numbers<[1], [0], [0], [1], [0, 0, 1, 1], [], []>} : vector<8x8xf32>, vector<8x32xf32>, vector<8x32xf32> -> vector<8x32xf32>
    %455 = arith.truncf %454 : vector<8x32xf32> to vector<8x32xbf16>
    %cst_252 = arith.constant dense<0.000000e+00> : vector<8x32xf32>
    %456 = tpu.matmul %455, %383, %cst_252 {dimension_numbers = #tpu.dot_dimension_numbers<[1], [0], [0], [1], [0, 0, 1, 1], [], []>} : vector<8x32xbf16>, vector<32x32xbf16>, vector<8x32xf32> -> vector<8x32xf32>
    %457 = arith.addf %446, %456 : vector<8x32xf32>
    %458 = vector.broadcast %385 : vector<1x32xf32> to vector<8x32xf32>
    %459 = arith.mulf %457, %458 : vector<8x32xf32>
    %460 = vector.broadcast %387 : vector<1x32xf32> to vector<8x32xf32>
    %461 = arith.addf %459, %460 : vector<8x32xf32>
    %cst_253 = arith.constant 0.000000e+00 : f32
    %462 = vector.broadcast %cst_253 : f32 to vector<8x32xf32>
    %463 = arith.maximumf %461, %462 : vector<8x32xf32>
    %c2_i32_254 = arith.constant 2 : i32
    %464 = vector.broadcast %c2_i32_254 : i32 to vector<4x8xi32>
    %465 = arith.muli %464, %406 : vector<4x8xi32>
    %c-1_i32_255 = arith.constant -1 : i32
    %466 = vector.broadcast %c-1_i32_255 : i32 to vector<4x8xi32>
    %467 = arith.addi %465, %466 : vector<4x8xi32>
    %468 = arith.cmpi eq, %407, %467 : vector<4x8xi32>
    %469 = arith.extui %468 : vector<4x8xi1> to vector<4x8xi32>
    %470 = arith.sitofp %469 : vector<4x8xi32> to vector<4x8xf32>
    %cst_256 = arith.constant dense<0.000000e+00> : vector<4x32xf32>
    %471 = tpu.matmul %470, %463, %cst_256 {dimension_numbers = #tpu.dot_dimension_numbers<[1], [0], [0], [1], [0, 0, 1, 1], [], []>} : vector<4x8xf32>, vector<8x32xf32>, vector<4x32xf32> -> vector<4x32xf32>
    %472 = arith.truncf %471 : vector<4x32xf32> to vector<4x32xbf16>
    %cst_257 = arith.constant dense<0.000000e+00> : vector<4x32xf32>
    %473 = tpu.matmul %472, %389, %cst_257 {dimension_numbers = #tpu.dot_dimension_numbers<[1], [0], [0], [1], [0, 0, 1, 1], [], []>} : vector<4x32xbf16>, vector<32x32xbf16>, vector<4x32xf32> -> vector<4x32xf32>
    %c2_i32_258 = arith.constant 2 : i32
    %474 = vector.broadcast %c2_i32_258 : i32 to vector<4x8xi32>
    %475 = arith.muli %474, %406 : vector<4x8xi32>
    %c0_i32_259 = arith.constant 0 : i32
    %476 = vector.broadcast %c0_i32_259 : i32 to vector<4x8xi32>
    %477 = arith.addi %475, %476 : vector<4x8xi32>
    %478 = arith.cmpi eq, %407, %477 : vector<4x8xi32>
    %479 = arith.extui %478 : vector<4x8xi1> to vector<4x8xi32>
    %480 = arith.sitofp %479 : vector<4x8xi32> to vector<4x8xf32>
    %cst_260 = arith.constant dense<0.000000e+00> : vector<4x32xf32>
    %481 = tpu.matmul %480, %463, %cst_260 {dimension_numbers = #tpu.dot_dimension_numbers<[1], [0], [0], [1], [0, 0, 1, 1], [], []>} : vector<4x8xf32>, vector<8x32xf32>, vector<4x32xf32> -> vector<4x32xf32>
    %482 = arith.truncf %481 : vector<4x32xf32> to vector<4x32xbf16>
    %cst_261 = arith.constant dense<0.000000e+00> : vector<4x32xf32>
    %483 = tpu.matmul %482, %391, %cst_261 {dimension_numbers = #tpu.dot_dimension_numbers<[1], [0], [0], [1], [0, 0, 1, 1], [], []>} : vector<4x32xbf16>, vector<32x32xbf16>, vector<4x32xf32> -> vector<4x32xf32>
    %484 = arith.addf %473, %483 : vector<4x32xf32>
    %c2_i32_262 = arith.constant 2 : i32
    %485 = vector.broadcast %c2_i32_262 : i32 to vector<4x8xi32>
    %486 = arith.muli %485, %406 : vector<4x8xi32>
    %c1_i32_263 = arith.constant 1 : i32
    %487 = vector.broadcast %c1_i32_263 : i32 to vector<4x8xi32>
    %488 = arith.addi %486, %487 : vector<4x8xi32>
    %489 = arith.cmpi eq, %407, %488 : vector<4x8xi32>
    %490 = arith.extui %489 : vector<4x8xi1> to vector<4x8xi32>
    %491 = arith.sitofp %490 : vector<4x8xi32> to vector<4x8xf32>
    %cst_264 = arith.constant dense<0.000000e+00> : vector<4x32xf32>
    %492 = tpu.matmul %491, %463, %cst_264 {dimension_numbers = #tpu.dot_dimension_numbers<[1], [0], [0], [1], [0, 0, 1, 1], [], []>} : vector<4x8xf32>, vector<8x32xf32>, vector<4x32xf32> -> vector<4x32xf32>
    %493 = arith.truncf %492 : vector<4x32xf32> to vector<4x32xbf16>
    %cst_265 = arith.constant dense<0.000000e+00> : vector<4x32xf32>
    %494 = tpu.matmul %493, %393, %cst_265 {dimension_numbers = #tpu.dot_dimension_numbers<[1], [0], [0], [1], [0, 0, 1, 1], [], []>} : vector<4x32xbf16>, vector<32x32xbf16>, vector<4x32xf32> -> vector<4x32xf32>
    %495 = arith.addf %484, %494 : vector<4x32xf32>
    %cst_266 = arith.constant dense<0.000000e+00> : vector<32xf32>
    %496 = vector.multi_reduction <add>, %495, %cst_266 [0] : vector<4x32xf32> to vector<32xf32>
    %497 = vector.shape_cast %496 : vector<32xf32> to vector<1x32xf32>
    %cst_267 = arith.constant 4.000000e+00 : f32
    %498 = vector.broadcast %cst_267 : f32 to vector<1x32xf32>
    %499 = arith.divf %497, %498 : vector<1x32xf32>
    %500 = arith.truncf %499 : vector<1x32xf32> to vector<1x32xbf16>
    %cst_268 = arith.constant dense<0.000000e+00> : vector<1x32xf32>
    %501 = tpu.matmul %500, %395, %cst_268 {dimension_numbers = #tpu.dot_dimension_numbers<[1], [0], [0], [1], [0, 0, 1, 1], [], []>} : vector<1x32xbf16>, vector<32x32xbf16>, vector<1x32xf32> -> vector<1x32xf32>
    %502 = arith.addf %501, %397 : vector<1x32xf32>
    %cst_269 = arith.constant 0.000000e+00 : f32
    %503 = vector.broadcast %cst_269 : f32 to vector<1x32xf32>
    %504 = arith.maximumf %502, %503 : vector<1x32xf32>
    %505 = arith.truncf %504 : vector<1x32xf32> to vector<1x32xbf16>
    %cst_270 = arith.constant dense<0.000000e+00> : vector<1x32xf32>
    %506 = tpu.matmul %505, %399, %cst_270 {dimension_numbers = #tpu.dot_dimension_numbers<[1], [0], [0], [1], [0, 0, 1, 1], [], []>} : vector<1x32xbf16>, vector<32x32xbf16>, vector<1x32xf32> -> vector<1x32xf32>
    %507 = arith.addf %506, %401 : vector<1x32xf32>
    %cst_271 = arith.constant 0.000000e+00 : f32
    %508 = vector.broadcast %cst_271 : f32 to vector<1x32xf32>
    %509 = arith.subf %508, %507 : vector<1x32xf32>
    %510 = math.exp %509 : vector<1x32xf32>
    %cst_272 = arith.constant 1.000000e+00 : f32
    %511 = vector.broadcast %cst_272 : f32 to vector<1x32xf32>
    %512 = arith.addf %511, %510 : vector<1x32xf32>
    %cst_273 = arith.constant 1.000000e+00 : f32
    %513 = vector.broadcast %cst_273 : f32 to vector<1x32xf32>
    %514 = arith.divf %513, %512 : vector<1x32xf32>
    %515 = vector.broadcast %514 : vector<1x32xf32> to vector<4x32xf32>
    %516 = arith.mulf %495, %515 : vector<4x32xf32>
    %517 = arith.addf %516, %425 : vector<4x32xf32>
    %518 = vector.extract_strided_slice %517 {offsets = [3, 0], sizes = [1, 32], strides = [1, 1]} : vector<4x32xf32> to vector<1x32xf32>
    %c0_274 = arith.constant 0 : index
    %c0_275 = arith.constant 0 : index
    %c0_276 = arith.constant 0 : index
    %519 = vector.load %arg4[%c0_274, %c0_275, %c0_276] : memref<1x1x32xf32, #tpu.memory_space<vmem>>, vector<1x1x32xf32>
    %520 = vector.shape_cast %519 : vector<1x1x32xf32> to vector<1x32xf32>
    %521 = vector.shape_cast %518 : vector<1x32xf32> to vector<1x1x32xf32>
    tpu.vector_store %arg4[%c0_274, %c0_275, %c0_276], %521 {strides = array<i32>} : memref<1x1x32xf32, #tpu.memory_space<vmem>>, vector<1x1x32xf32>,
    return
  }
  func.func @transform_0(%arg0: i32) -> (i32, i32, i32) {
    %c0_i32 = arith.constant 0 : i32
    %c0_i32_0 = arith.constant 0 : i32
    %c0_i32_1 = arith.constant 0 : i32
    return %arg0, %c0_i32, %c0_i32_0 : i32, i32, i32
  }
  func.func @transform_1(%arg0: i32) -> (i32, i32, i32) {
    %c0_i32 = arith.constant 0 : i32
    %c0_i32_0 = arith.constant 0 : i32
    %c0_i32_1 = arith.constant 0 : i32
    %c0_i32_2 = arith.constant 0 : i32
    return %c0_i32, %c0_i32_0, %c0_i32_1 : i32, i32, i32
  }
  func.func @transform_2(%arg0: i32) -> (i32, i32, i32) {
    %c0_i32 = arith.constant 0 : i32
    %c0_i32_0 = arith.constant 0 : i32
    %c0_i32_1 = arith.constant 0 : i32
    %c0_i32_2 = arith.constant 0 : i32
    return %c0_i32, %c0_i32_0, %c0_i32_1 : i32, i32, i32
  }
  func.func @transform_3(%arg0: i32) -> (i32, i32, i32) {
    %c0_i32 = arith.constant 0 : i32
    %c0_i32_0 = arith.constant 0 : i32
    %c0_i32_1 = arith.constant 0 : i32
    return %arg0, %c0_i32, %c0_i32_0 : i32, i32, i32
  }
}

</mosaic_0001>

<llo_original>
// kernel: h_agent_temporal_encoder.1
$region0: #{h_agent_temporal_encoder.1}
  #allocation0 [shape = 'u32[]', space=smem, size = 0x4, offset = 0x4, fixed_abs, tag = 'smem constant byte address 0x4 - core index']
  #allocation1 [shape = 'u32[72,128]{1,0:T(1,128)}', space=vmem, size = 0x9000, scoped, tag = 'internal scratch']
  %s0 = inlined_call_operand.vmem [shape: f32[2,16,32], index: 0, kind: input, shape index: {}]
  %s1 = inlined_call_operand.vmem [shape: f32[26,1,32], index: 1, kind: input, shape index: {}]
  %s2 = inlined_call_operand.vmem [shape: bf16[34,32,32], index: 2, kind: input, shape index: {}]
  %s3 = inlined_call_operand.hbm [shape: f32[2,1,32], index: 3, kind: output, shape index: {}]
  %s4 = sld [smem:[#allocation0]]
  $region45: #{h_agent_temporal_encoder.1} parent=0
    _
  %s6 = ssub.s32 1, %s4
  %s7 = scalar_select 0, %s6, %s4
  $region1: #{h_agent_temporal_encoder.1} parent=0
    #allocation2 [shape = 'u8[1024]{0}', space=vmem, size = 0x400, scoped, tag = 'output window, operand 0']
    #allocation3 [shape = 's32[2]{0}', space=sflag, size = 0x8, scoped, tag = 'scoped memory for h_agent_temporal_encoder.1']
    %8 = vsyncpa [#allocation3], 0
    %s9 = scalar_lea.sflag [#allocation3], 1
    %10 = vsyncpa %s9, 0
    loop: start=0, step=1, limit=4
    $region2: #{h_agent_temporal_encoder.1} parent=1 // loop_pre_header
      _
    $region3: #{h_agent_temporal_encoder.1} parent=1 // loop_header
      %s12 = sphi 0, %s16
      %p13 = scmp.ge.s32.totalorder %s12, 4
      %s22 = sphi 0, %s24
      %s25 = sphi 0, %s22
      %s26 = sphi 0, %s25
      %s42 = sphi 0, %s26
      %s46 = sphi 0, %s46
      %s48 = sphi 0, %s46
      %s49 = sphi 0, %s48
      %s63 = sphi 0, %s49
      %s67 = sphi 0, %s67
      %s69 = sphi 0, %s67
      %s70 = sphi 0, %s69
      %s84 = sphi 0, %s70
      %s90 = sphi 0, %s92
      %s93 = sphi 0, %s90
      %s94 = sphi 0, %s93
      %s110 = sphi 0, %s94
    $region4: #{h_agent_temporal_encoder.1} parent=1 // loop_header_branch
      %15 = sbr.rel (%p13) target = $region8
    $region5: #{h_agent_temporal_encoder.1} parent=1 // loop_body
      %s17 = ssub.s32 %s12, 1
      %s18 = ssub.s32 %s12, 2
      %s19 = sadd.s32 %s12, 1
      %s20 = ssub.s32 %s12, %s19
      %p21 = scmp.eq.s32.totalorder %s20, 0
      %s23 = sadd.s32 %s22, 1
      %s24 = scalar_select %p21, %s22, %s23
      %p27 = pneg %p21
      %p28 = scmp.eq.s32.totalorder %s12, 1
      %p29 = por %p27, %p28
      %p30 = scmp.ne.s32.totalorder %s22, %s25
      %p31 = scmp.eq.s32.totalorder %s12, 0
      %p32 = por %p30, %p31
      %p33 = scmp.ne.s32.totalorder %s22, %s25
      %p34 = scmp.eq.s32.totalorder %s17, 1
      %p35 = por %p33, %p34
      %p36 = scmp.ne.s32.totalorder %s25, %s26
      %p37 = scmp.eq.s32.totalorder %s17, 0
      %p38 = por %p36, %p37
      %p39 = scmp.ne.s32.totalorder %s25, %s26
      %p40 = scmp.eq.s32.totalorder %s18, 1
      %p41 = por %p39, %p40
      %p43 = scmp.ne.s32.totalorder %s26, %s42
      %p44 = scmp.eq.s32.totalorder %s18, 0
      %p45 = por %p43, %p44
      %s47 = sadd.s32 %s46, 1
      %p50 = scmp.eq.s32.totalorder %s12, 1
      %p51 = scmp.ne.s32.totalorder %s46, %s48
      %p52 = scmp.eq.s32.totalorder %s12, 0
      %p53 = por %p51, %p52
      %p54 = scmp.ne.s32.totalorder %s46, %s48
      %p55 = scmp.eq.s32.totalorder %s17, 1
      %p56 = por %p54, %p55
      %p57 = scmp.ne.s32.totalorder %s48, %s49
      %p58 = scmp.eq.s32.totalorder %s17, 0
      %p59 = por %p57, %p58
      %p60 = scmp.ne.s32.totalorder %s48, %s49
      %p61 = scmp.eq.s32.totalorder %s18, 1
      %p62 = por %p60, %p61
      %p64 = scmp.ne.s32.totalorder %s49, %s63
      %p65 = scmp.eq.s32.totalorder %s18, 0
      %p66 = por %p64, %p65
      %s68 = sadd.s32 %s67, 1
      %p71 = scmp.eq.s32.totalorder %s12, 1
      %p72 = scmp.ne.s32.totalorder %s67, %s69
      %p73 = scmp.eq.s32.totalorder %s12, 0
      %p74 = por %p72, %p73
      %p75 = scmp.ne.s32.totalorder %s67, %s69
      %p76 = scmp.eq.s32.totalorder %s17, 1
      %p77 = por %p75, %p76
      %p78 = scmp.ne.s32.totalorder %s69, %s70
      %p79 = scmp.eq.s32.totalorder %s17, 0
      %p80 = por %p78, %p79
      %p81 = scmp.ne.s32.totalorder %s69, %s70
      %p82 = scmp.eq.s32.totalorder %s18, 1
      %p83 = por %p81, %p82
      %p85 = scmp.ne.s32.totalorder %s70, %s84
      %p86 = scmp.eq.s32.totalorder %s18, 0
      %p87 = por %p85, %p86
      %s88 = ssub.s32 %s12, %s19
      %p89 = scmp.eq.s32.totalorder %s88, 0
      %s91 = sadd.s32 %s90, 1
      %s92 = scalar_select %p89, %s90, %s91
      %p95 = pneg %p89
      %p96 = scmp.eq.s32.totalorder %s12, 1
      %p97 = por %p95, %p96
      %p98 = scmp.ne.s32.totalorder %s90, %s93
      %p99 = scmp.eq.s32.totalorder %s12, 0
      %p100 = por %p98, %p99
      %p101 = scmp.ne.s32.totalorder %s90, %s93
      %p102 = scmp.eq.s32.totalorder %s17, 1
      %p103 = por %p101, %p102
      %p104 = scmp.ne.s32.totalorder %s93, %s94
      %p105 = scmp.eq.s32.totalorder %s17, 0
      %p106 = por %p104, %p105
      %p107 = scmp.ne.s32.totalorder %s93, %s94
      %p108 = scmp.eq.s32.totalorder %s18, 1
      %p109 = por %p107, %p108
      %p111 = scmp.ne.s32.totalorder %s94, %s110
      %p112 = scmp.eq.s32.totalorder %s18, 0
      %p113 = por %p111, %p112
      %p114 = scmp.le.s32.totalorder 1, %s12
      %p115 = scmp.lt.s32.totalorder %s12, 3
      %p116 = pnand %p114, %p115
      %p117 = pneg %p116
      // Predicated region
      $region9: #{h_agent_temporal_encoder.1} parent=5 // pred_check
        _
      $region10: #{h_agent_temporal_encoder.1} parent=5 // pred_check_branch
        %119 = sbr.rel (%p116) target = $region12
      $region11: #{h_agent_temporal_encoder.1} parent=5 // pred_region
        %s120 = ssub.s32 %s12, 1
        // Predicated region
        $region13: #{h_agent_temporal_encoder.1} parent=11 // pred_check
          %p121 = pneg %p59
        $region14: #{h_agent_temporal_encoder.1} parent=11 // pred_check_branch
          %123 = sbr.rel (%p121) target = $region16
        $region15: #{h_agent_temporal_encoder.1} parent=11 // pred_region
          _
        $region16: #{h_agent_temporal_encoder.1} parent=11 // pred_fallthru
          _
        // Predicated region
        $region17: #{h_agent_temporal_encoder.1} parent=11 // pred_check
          %p124 = pneg %p80
        $region18: #{h_agent_temporal_encoder.1} parent=11 // pred_check_branch
          %126 = sbr.rel (%p124) target = $region20
        $region19: #{h_agent_temporal_encoder.1} parent=11 // pred_region
          _
        $region20: #{h_agent_temporal_encoder.1} parent=11 // pred_fallthru
          _
      $region12: #{h_agent_temporal_encoder.1} parent=5 // pred_fallthru
        _
      %p127 = scmp.lt.s32.totalorder %s12, 2
      // Predicated region
      $region21: #{h_agent_temporal_encoder.1} parent=5 // pred_check
        %p128 = pneg %p127
      $region22: #{h_agent_temporal_encoder.1} parent=5 // pred_check_branch
        %130 = sbr.rel (%p128) target = $region24
      $region23: #{h_agent_temporal_encoder.1} parent=5 // pred_region
        // Predicated region
        $region25: #{h_agent_temporal_encoder.1} parent=23 // pred_check
          %p131 = pneg %p32
        $region26: #{h_agent_temporal_encoder.1} parent=23 // pred_check_branch
          %133 = sbr.rel (%p131) target = $region28
        $region27: #{h_agent_temporal_encoder.1} parent=23 // pred_region
          %p134 = scmp.lt.s32.totalorder %s12, 1
          %s135 = scalar_select %p134, %s12, 1
          %s136 = smul.addr %s135, 2
          %s137 = smul.addr %s136, 8
          %s138 = scalar_lea.vmem %s0, %s137
        $region28: #{h_agent_temporal_encoder.1} parent=23 // pred_fallthru
          _
      $region24: #{h_agent_temporal_encoder.1} parent=5 // pred_fallthru
        _
      %p139 = scmp.le.s32.totalorder 1, %s12
      %p140 = scmp.lt.s32.totalorder %s12, 3
      %p141 = pnand %p139, %p140
      %p142 = pneg %p141
      // Predicated region
      $region29: #{h_agent_temporal_encoder.1} parent=5 // pred_check
        _
      $region30: #{h_agent_temporal_encoder.1} parent=5 // pred_check_branch
        %144 = sbr.rel (%p141) target = $region32
      $region31: #{h_agent_temporal_encoder.1} parent=5 // pred_region
        %s145 = ssub.s32 %s12, 1
        %p146 = scmp.lt.s32.totalorder %s17, 1
        %s147 = scalar_select %p146, %s17, 1
        %s148 = smul.addr %s147, 2
        %s149 = smul.addr %s148, 8
        %s150 = scalar_lea.vmem %s0, %s149
        %p151 = pneg %p38
        %p152 = pneg %p35
        %p153 = pneg %p59
        %p154 = pneg %p56
        %p155 = pneg %p80
        %p156 = pneg %p77
        %p157 = pneg %p106
        %p158 = pneg %p103
        %s159 = sand.u32 %s93, 1
        %s160 = scalar_lea.sflag [#allocation3], %s159
        %s161 = sand.u32 %s93, 1
        %s162 = scalar_lea.vmem [#allocation2], %s161
        %p163 = scmp.lt.s32.totalorder %s17, 1
        %s164 = scalar_select %p163, %s17, 1
        %s165 = smul.addr %s164, 2
        %s166 = smul.addr %s165, 8
        %s167 = scalar_lea.vmem %s0, %s166
        %v169 = vld [vmem:[%s167] sm:$0xff]
        %v170 = vld [vmem:[%s167 + $0x8] sm:$0xff]
        %v171 = vld [vmem:[%s1] sm:$0x1]
        %s172 = scalar_lea.vmem %s1, 1
        %v173 = vld [vmem:[%s172] sm:$0x1]
        %v174 = vld [vmem:[%s2] sm:$0xf]
        %v175 = vld [vmem:[%s2 + $0x4] sm:$0xf]
        %v176 = vld [vmem:[%s2 + $0x8] sm:$0xf]
        %v177 = vld [vmem:[%s2 + $0xc] sm:$0xf]
        %s178 = scalar_lea.vmem %s2, 16
        %v179 = vld [vmem:[%s178] sm:$0xf]
        %v180 = vld [vmem:[%s178 + $0x4] sm:$0xf]
        %v181 = vld [vmem:[%s178 + $0x8] sm:$0xf]
        %v182 = vld [vmem:[%s178 + $0xc] sm:$0xf]
        %s183 = scalar_lea.vmem %s2, 32
        %v184 = vld [vmem:[%s183] sm:$0xf]
        %v185 = vld [vmem:[%s183 + $0x4] sm:$0xf]
        %v186 = vld [vmem:[%s183 + $0x8] sm:$0xf]
        %v187 = vld [vmem:[%s183 + $0xc] sm:$0xf]
        %s188 = scalar_lea.vmem %s1, 2
        %v189 = vld [vmem:[%s188] sm:$0x1]
        %s190 = scalar_lea.vmem %s1, 3
        %v191 = vld [vmem:[%s190] sm:$0x1]
        %s192 = scalar_lea.vmem %s2, 48
        %v193 = vld [vmem:[%s192] sm:$0xf]
        %v194 = vld [vmem:[%s192 + $0x4] sm:$0xf]
        %v195 = vld [vmem:[%s192 + $0x8] sm:$0xf]
        %v196 = vld [vmem:[%s192 + $0xc] sm:$0xf]
        %s197 = scalar_lea.vmem %s2, 64
        %v198 = vld [vmem:[%s197] sm:$0xf]
        %v199 = vld [vmem:[%s197 + $0x4] sm:$0xf]
        %v200 = vld [vmem:[%s197 + $0x8] sm:$0xf]
        %v201 = vld [vmem:[%s197 + $0xc] sm:$0xf]
        %s202 = scalar_lea.vmem %s2, 80
        %v203 = vld [vmem:[%s202] sm:$0xf]
        %v204 = vld [vmem:[%s202 + $0x4] sm:$0xf]
        %v205 = vld [vmem:[%s202 + $0x8] sm:$0xf]
        %v206 = vld [vmem:[%s202 + $0xc] sm:$0xf]
        %s207 = scalar_lea.vmem %s2, 96
        %v208 = vld [vmem:[%s207] sm:$0xf]
        %v209 = vld [vmem:[%s207 + $0x4] sm:$0xf]
        %v210 = vld [vmem:[%s207 + $0x8] sm:$0xf]
        %v211 = vld [vmem:[%s207 + $0xc] sm:$0xf]
        %s212 = scalar_lea.vmem %s1, 4
        %v213 = vld [vmem:[%s212] sm:$0x1]
        %s214 = scalar_lea.vmem %s2, 112
        %v215 = vld [vmem:[%s214] sm:$0xf]
        %v216 = vld [vmem:[%s214 + $0x4] sm:$0xf]
        %v217 = vld [vmem:[%s214 + $0x8] sm:$0xf]
        %v218 = vld [vmem:[%s214 + $0xc] sm:$0xf]
        %s219 = scalar_lea.vmem %s1, 5
        %v220 = vld [vmem:[%s219] sm:$0x1]
        %v222 = vperm.slane %v171, 0
        %v224 = vmul.f32 %v169, %v222
        %v225 = vmul.f32 %v170, %v222
        %v227 = vperm.slane %v173, 0
        %v229 = vadd.f32 %v224, %v227
        %v230 = vadd.f32 %v225, %v227
        %v231 = vmax.f32 %v229, 0.0
        %v232 = vmax.f32 %v230, 0.0
        %v233 = vlaneseq
        %v234 = vshrl.u32 %v233, 7
        %v235 = vadd.s32 %v234, 8
        %v236 = vlaneseq
        %v237 = vand.u32 %v236, 127
        %v238 = vadd.s32 %v234, 4294967295
        %v239 = vadd.s32 %v235, 4294967295
        %vm240 = vcmp.eq.s32.totalorder %v237, %v238
        %vm241 = vcmp.eq.s32.totalorder %v237, %v239
        %v242 = vsel %vm240, 1, 0
        %v243 = vsel %vm241, 1, 0
        %v244 = vcvt.s32.f32 %v242
        %v245 = vcvt.s32.f32 %v243
        %vm246 = vcmask 130048
        %v248 = vsel %vm246, %v244, 0
        %v251 = vsel %vm246, %v245, 0
        %253 = vmatpush.msra.mxu0 0.0
        %254 = vmatpush.msra.mxu0 0.0
        %255 = vmatpush.msra.mxu0 0.0
        %256 = vmatpush.msra.mxu0 0.0
        %257 = vmatpush.msra.mxu0 0.0
        %258 = vmatpush.msra.mxu0 0.0
        %259 = vmatpush.msra.mxu0 0.0
        %260 = vmatpush.msra.mxu0 0.0
        %261 = vmatpush.msra.mxu0 0.0
        %262 = vmatpush.msra.mxu0 0.0
        %263 = vmatpush.msra.mxu0 0.0
        %264 = vmatpush.msra.mxu0 0.0
        %265 = vmatpush.msra.mxu0 0.0
        %266 = vmatpush.msra.mxu0 0.0
        %267 = vmatpush.msra.mxu0 %v232
        %268 = vmatpush.msra.mxu0 %v231
        %269 = vmatmul.f32.gmra.mxu0 %v248
        %v270 = vpop.f32.mrf.mxu0
        %v271 = vadd.f32 0.0, %v270
        %272 = vmatmul.f32.gmra.mxu0 %v251
        %v273 = vpop.f32.mrf.mxu0
        %v274 = vadd.f32 0.0, %v273
        %275 = vdwg.mxu0
        %v276 = vpack.c.bf16 %v274, %v271
        %v277 = vpack.c.bf16 %v232, %v231
        %v282 = vunpack.c.l.b16 %v179
        %v283 = vunpack.c.l.b16 %v180
        %v284 = vunpack.c.l.b16 %v181
        %v285 = vunpack.c.l.b16 %v182
        %v286 = vpack.c.b16 %v283, %v282
        %v287 = vpack.c.b16 %v285, %v284
        %vm290 = vcmask 261120
        %v292 = vsel %vm290, %v277, 0
        %294 = vmatpush.bf16.msra.mxu0 0
        %295 = vmatpush.bf16.msra.mxu0 0
        %296 = vmatpush.bf16.msra.mxu0 0
        %297 = vmatpush.bf16.msra.mxu0 0
        %298 = vmatpush.bf16.msra.mxu0 0
        %299 = vmatpush.bf16.msra.mxu0 0
        %300 = vmatpush.bf16.msra.mxu0 %v287
        %301 = vmatpush.bf16.msra.mxu0 %v286
        %302 = vmatmul.bf16.gmra.mxu0 %v292
        %v303 = vpop.f32.mrf.mxu0
        %v304 = vadd.f32 0.0, %v303
        %v305 = vpop.f32.mrf.mxu0
        %v306 = vadd.f32 0.0, %v305
        %307 = vdwg.mxu0
        %v312 = vunpack.c.l.b16 %v174
        %v313 = vunpack.c.l.b16 %v175
        %v314 = vunpack.c.l.b16 %v176
        %v315 = vunpack.c.l.b16 %v177
        %v316 = vpack.c.b16 %v313, %v312
        %v317 = vpack.c.b16 %v315, %v314
        %v321 = vsel %vm290, %v276, 0
        %323 = vmatpush.bf16.msra.mxu0 0
        %324 = vmatpush.bf16.msra.mxu0 0
        %325 = vmatpush.bf16.msra.mxu0 0
        %326 = vmatpush.bf16.msra.mxu0 0
        %327 = vmatpush.bf16.msra.mxu0 0
        %328 = vmatpush.bf16.msra.mxu0 0
        %329 = vmatpush.bf16.msra.mxu0 %v317
        %330 = vmatpush.bf16.msra.mxu0 %v316
        %331 = vmatmul.bf16.gmra.mxu0 %v321
        %v332 = vpop.f32.mrf.mxu0
        %v333 = vadd.f32 %v304, %v332
        %v334 = vpop.f32.mrf.mxu0
        %v335 = vadd.f32 %v306, %v334
        %336 = vdwg.mxu0
        %v337 = vadd.s32 %v234, 1
        %v338 = vadd.s32 %v235, 1
        %vm339 = vcmp.eq.s32.totalorder %v237, %v337
        %vm340 = vcmp.eq.s32.totalorder %v237, %v338
        %v341 = vsel %vm339, 1, 0
        %v342 = vsel %vm340, 1, 0
        %v343 = vcvt.s32.f32 %v341
        %v344 = vcvt.s32.f32 %v342
        %v346 = vsel %vm246, %v343, 0
        %v349 = vsel %vm246, %v344, 0
        %351 = vmatpush.msra.mxu0 0.0
        %352 = vmatpush.msra.mxu0 0.0
        %353 = vmatpush.msra.mxu0 0.0
        %354 = vmatpush.msra.mxu0 0.0
        %355 = vmatpush.msra.mxu0 0.0
        %356 = vmatpush.msra.mxu0 0.0
        %357 = vmatpush.msra.mxu0 0.0
        %358 = vmatpush.msra.mxu0 0.0
        %359 = vmatpush.msra.mxu0 0.0
        %360 = vmatpush.msra.mxu0 0.0
        %361 = vmatpush.msra.mxu0 0.0
        %362 = vmatpush.msra.mxu0 0.0
        %363 = vmatpush.msra.mxu0 0.0
        %364 = vmatpush.msra.mxu0 0.0
        %365 = vmatpush.msra.mxu0 %v232
        %366 = vmatpush.msra.mxu0 %v231
        %367 = vmatmul.f32.gmra.mxu0 %v346
        %v368 = vpop.f32.mrf.mxu0
        %v369 = vadd.f32 0.0, %v368
        %370 = vmatmul.f32.gmra.mxu0 %v349
        %v371 = vpop.f32.mrf.mxu0
        %v372 = vadd.f32 0.0, %v371
        %373 = vdwg.mxu0
        %v374 = vpack.c.bf16 %v372, %v369
        %v379 = vunpack.c.l.b16 %v184
        %v380 = vunpack.c.l.b16 %v185
        %v381 = vunpack.c.l.b16 %v186
        %v382 = vunpack.c.l.b16 %v187
        %v383 = vpack.c.b16 %v380, %v379
        %v384 = vpack.c.b16 %v382, %v381
        %v388 = vsel %vm290, %v374, 0
        %390 = vmatpush.bf16.msra.mxu0 0
        %391 = vmatpush.bf16.msra.mxu0 0
        %392 = vmatpush.bf16.msra.mxu0 0
        %393 = vmatpush.bf16.msra.mxu0 0
        %394 = vmatpush.bf16.msra.mxu0 0
        %395 = vmatpush.bf16.msra.mxu0 0
        %396 = vmatpush.bf16.msra.mxu0 %v384
        %397 = vmatpush.bf16.msra.mxu0 %v383
        %398 = vmatmul.bf16.gmra.mxu0 %v388
        %v399 = vpop.f32.mrf.mxu0
        %v400 = vadd.f32 0.0, %v399
        %v401 = vpop.f32.mrf.mxu0
        %v402 = vadd.f32 0.0, %v401
        %403 = vdwg.mxu0
        %v404 = vadd.f32 %v333, %v400
        %v405 = vadd.f32 %v335, %v402
        %v407 = vperm.slane %v189, 0
        %v409 = vmul.f32 %v404, %v407
        %v410 = vmul.f32 %v405, %v407
        %v412 = vperm.slane %v191, 0
        %v414 = vadd.f32 %v409, %v412
        %v415 = vadd.f32 %v410, %v412
        %v416 = vmax.f32 %v414, 0.0
        %v417 = vmax.f32 %v415, 0.0
        %418 = vmatpush.msra.mxu0 0.0
        %419 = vmatpush.msra.mxu0 0.0
        %420 = vmatpush.msra.mxu0 0.0
        %421 = vmatpush.msra.mxu0 0.0
        %422 = vmatpush.msra.mxu0 0.0
        %423 = vmatpush.msra.mxu0 0.0
        %424 = vmatpush.msra.mxu0 0.0
        %425 = vmatpush.msra.mxu0 0.0
        %426 = vmatpush.msra.mxu0 0.0
        %427 = vmatpush.msra.mxu0 0.0
        %428 = vmatpush.msra.mxu0 0.0
        %429 = vmatpush.msra.mxu0 0.0
        %430 = vmatpush.msra.mxu0 0.0
        %431 = vmatpush.msra.mxu0 0.0
        %432 = vmatpush.msra.mxu0 %v417
        %433 = vmatpush.msra.mxu0 %v416
        %434 = vmatmul.f32.gmra.mxu0 %v248
        %v435 = vpop.f32.mrf.mxu0
        %v436 = vadd.f32 0.0, %v435
        %437 = vmatmul.f32.gmra.mxu0 %v251
        %v438 = vpop.f32.mrf.mxu0
        %v439 = vadd.f32 0.0, %v438
        %440 = vdwg.mxu0
        %v441 = vpack.c.bf16 %v439, %v436
        %v442 = vpack.c.bf16 %v417, %v416
        %v447 = vunpack.c.l.b16 %v198
        %v448 = vunpack.c.l.b16 %v199
        %v449 = vunpack.c.l.b16 %v200
        %v450 = vunpack.c.l.b16 %v201
        %v451 = vpack.c.b16 %v448, %v447
        %v452 = vpack.c.b16 %v450, %v449
        %v456 = vsel %vm290, %v442, 0
        %458 = vmatpush.bf16.msra.mxu0 0
        %459 = vmatpush.bf16.msra.mxu0 0
        %460 = vmatpush.bf16.msra.mxu0 0
        %461 = vmatpush.bf16.msra.mxu0 0
        %462 = vmatpush.bf16.msra.mxu0 0
        %463 = vmatpush.bf16.msra.mxu0 0
        %464 = vmatpush.bf16.msra.mxu0 %v452
        %465 = vmatpush.bf16.msra.mxu0 %v451
        %466 = vmatmul.bf16.gmra.mxu0 %v456
        %v467 = vpop.f32.mrf.mxu0
        %v468 = vadd.f32 0.0, %v467
        %v469 = vpop.f32.mrf.mxu0
        %v470 = vadd.f32 0.0, %v469
        %471 = vdwg.mxu0
        %v476 = vunpack.c.l.b16 %v193
        %v477 = vunpack.c.l.b16 %v194
        %v478 = vunpack.c.l.b16 %v195
        %v479 = vunpack.c.l.b16 %v196
        %v480 = vpack.c.b16 %v477, %v476
        %v481 = vpack.c.b16 %v479, %v478
        %v485 = vsel %vm290, %v441, 0
        %487 = vmatpush.bf16.msra.mxu0 0
        %488 = vmatpush.bf16.msra.mxu0 0
        %489 = vmatpush.bf16.msra.mxu0 0
        %490 = vmatpush.bf16.msra.mxu0 0
        %491 = vmatpush.bf16.msra.mxu0 0
        %492 = vmatpush.bf16.msra.mxu0 0
        %493 = vmatpush.bf16.msra.mxu0 %v481
        %494 = vmatpush.bf16.msra.mxu0 %v480
        %495 = vmatmul.bf16.gmra.mxu0 %v485
        %v496 = vpop.f32.mrf.mxu0
        %v497 = vadd.f32 %v468, %v496
        %v498 = vpop.f32.mrf.mxu0
        %v499 = vadd.f32 %v470, %v498
        %500 = vdwg.mxu0
        %501 = vmatpush.msra.mxu0 0.0
        %502 = vmatpush.msra.mxu0 0.0
        %503 = vmatpush.msra.mxu0 0.0
        %504 = vmatpush.msra.mxu0 0.0
        %505 = vmatpush.msra.mxu0 0.0
        %506 = vmatpush.msra.mxu0 0.0
        %507 = vmatpush.msra.mxu0 0.0
        %508 = vmatpush.msra.mxu0 0.0
        %509 = vmatpush.msra.mxu0 0.0
        %510 = vmatpush.msra.mxu0 0.0
        %511 = vmatpush.msra.mxu0 0.0
        %512 = vmatpush.msra.mxu0 0.0
        %513 = vmatpush.msra.mxu0 0.0
        %514 = vmatpush.msra.mxu0 0.0
        %515 = vmatpush.msra.mxu0 %v417
        %516 = vmatpush.msra.mxu0 %v416
        %517 = vmatmul.f32.gmra.mxu0 %v346
        %v518 = vpop.f32.mrf.mxu0
        %v519 = vadd.f32 0.0, %v518
        %520 = vmatmul.f32.gmra.mxu0 %v349
        %v521 = vpop.f32.mrf.mxu0
        %v522 = vadd.f32 0.0, %v521
        %523 = vdwg.mxu0
        %v524 = vpack.c.bf16 %v522, %v519
        %v529 = vunpack.c.l.b16 %v203
        %v530 = vunpack.c.l.b16 %v204
        %v531 = vunpack.c.l.b16 %v205
        %v532 = vunpack.c.l.b16 %v206
        %v533 = vpack.c.b16 %v530, %v529
        %v534 = vpack.c.b16 %v532, %v531
        %v538 = vsel %vm290, %v524, 0
        %540 = vmatpush.bf16.msra.mxu0 0
        %541 = vmatpush.bf16.msra.mxu0 0
        %542 = vmatpush.bf16.msra.mxu0 0
        %543 = vmatpush.bf16.msra.mxu0 0
        %544 = vmatpush.bf16.msra.mxu0 0
        %545 = vmatpush.bf16.msra.mxu0 0
        %546 = vmatpush.bf16.msra.mxu0 %v534
        %547 = vmatpush.bf16.msra.mxu0 %v533
        %548 = vmatmul.bf16.gmra.mxu0 %v538
        %v549 = vpop.f32.mrf.mxu0
        %v550 = vadd.f32 0.0, %v549
        %v551 = vpop.f32.mrf.mxu0
        %v552 = vadd.f32 0.0, %v551
        %553 = vdwg.mxu0
        %v554 = vadd.f32 %v497, %v550
        %v555 = vadd.f32 %v499, %v552
        %v556 = vsel %vm290, %v554, 0.0
        %v557 = vsel %vm290, %v555, 0.0
        %v558 = vadd.f32 %v556, %v557
        %v559 = vrot.slane %v558, 4
        %v560 = vadd.f32 %v558, %v559
        %v561 = vrot.slane %v560, 2
        %v562 = vadd.f32 %v560, %v561
        %v563 = vrot.slane %v562, 1
        %v564 = vadd.f32 %v562, %v563
        %v565 = vrcp.pop 16.0
        %v566 = vmul.f32 16.0, %v565
        %v567 = vsub.f32 1.0, %v566
        %v568 = vmul.f32 %v565, %v567
        %v569 = vadd.f32 %v565, %v568
        %vm570 = vweird.f32 %v565
        %v571 = vsel %vm570, %v565, %v569
        %v572 = vmul.f32 %v564, %v571
        %v573 = vpack.c.bf16 %v572, %v572
        %v578 = vunpack.c.l.b16 %v208
        %v579 = vunpack.c.l.b16 %v209
        %v580 = vunpack.c.l.b16 %v210
        %v581 = vunpack.c.l.b16 %v211
        %v582 = vpack.c.b16 %v579, %v578
        %v583 = vpack.c.b16 %v581, %v580
        %v587 = vsel %vm290, %v573, 0
        %589 = vmatpush.bf16.msra.mxu0 0
        %590 = vmatpush.bf16.msra.mxu0 0
        %591 = vmatpush.bf16.msra.mxu0 0
        %592 = vmatpush.bf16.msra.mxu0 0
        %593 = vmatpush.bf16.msra.mxu0 0
        %594 = vmatpush.bf16.msra.mxu0 0
        %595 = vmatpush.bf16.msra.mxu0 %v583
        %596 = vmatpush.bf16.msra.mxu0 %v582
        %597 = vmatmul.bf16.gmra.mxu0 %v587
        %v598 = vpop.f32.mrf.mxu0
        %v599 = vadd.f32 %v213, %v598
        %v600 = vpop.f32.mrf.mxu0
        %601 = vdwg.mxu0
        %v602 = vmax.f32 %v599, 0.0
        %v603 = vpack.c.bf16 %v602, %v602
        %v608 = vunpack.c.l.b16 %v215
        %v609 = vunpack.c.l.b16 %v216
        %v610 = vunpack.c.l.b16 %v217
        %v611 = vunpack.c.l.b16 %v218
        %v612 = vpack.c.b16 %v609, %v608
        %v613 = vpack.c.b16 %v611, %v610
        %v617 = vsel %vm290, %v603, 0
        %619 = vmatpush.bf16.msra.mxu0 0
        %620 = vmatpush.bf16.msra.mxu0 0
        %621 = vmatpush.bf16.msra.mxu0 0
        %622 = vmatpush.bf16.msra.mxu0 0
        %623 = vmatpush.bf16.msra.mxu0 0
        %624 = vmatpush.bf16.msra.mxu0 0
        %625 = vmatpush.bf16.msra.mxu0 %v613
        %626 = vmatpush.bf16.msra.mxu0 %v612
        %627 = vmatmul.bf16.gmra.mxu0 %v617
        %v628 = vpop.f32.mrf.mxu0
        %v629 = vadd.f32 %v220, %v628
        %v630 = vpop.f32.mrf.mxu0
        %631 = vdwg.mxu0
        %v632 = vsub.f32 0.0, %v629
        %v633 = vmul.f32 %v632, 1.442695
        %v634 = vpow.pop %v633
        %v635 = vadd.f32 %v634, 1.0
        %v636 = vrcp.pop %v635
        %v637 = vmul.f32 %v635, %v636
        %v638 = vsub.f32 1.0, %v637
        %v639 = vmul.f32 %v636, %v638
        %v640 = vadd.f32 %v636, %v639
        %vm641 = vweird.f32 %v635
        %vm642 = vweird.f32 %v636
        %vm643 = vmor %vm641, %vm642
        %v644 = vsel %vm643, %v636, %v640
        %v645 = vand.u32 2147483647, %v635
        %vm646 = vcmp.eq.f32.partialorder %v645, 8.507059e+37
        %v647 = vand.u32 %v635, 2147483648
        %v648 = vor.u32 1.1754944e-38, %v647
        %v649 = vsel %vm646, %v648, %v644
        %v650 = vmul.f32 1.0, %v649
        %v651 = vperm.slane %v650, 0
        %v652 = vmul.f32 %v554, %v651
        %v653 = vmul.f32 %v555, %v651
        %v654 = vadd.f32 %v652, %v169
        %v655 = vadd.f32 %v653, %v170
        %s656 = scalar_lea.vmem %s1, 6
        %v657 = vld [vmem:[%s656] sm:$0x1]
        %s658 = scalar_lea.vmem %s1, 7
        %v659 = vld [vmem:[%s658] sm:$0x1]
        %s660 = scalar_lea.vmem %s2, 128
        %v661 = vld [vmem:[%s660] sm:$0xf]
        %v662 = vld [vmem:[%s660 + $0x4] sm:$0xf]
        %v663 = vld [vmem:[%s660 + $0x8] sm:$0xf]
        %v664 = vld [vmem:[%s660 + $0xc] sm:$0xf]
        %s665 = scalar_lea.vmem %s2, 144
        %v666 = vld [vmem:[%s665] sm:$0xf]
        %v667 = vld [vmem:[%s665 + $0x4] sm:$0xf]
        %v668 = vld [vmem:[%s665 + $0x8] sm:$0xf]
        %v669 = vld [vmem:[%s665 + $0xc] sm:$0xf]
        %s670 = scalar_lea.vmem %s2, 160
        %v671 = vld [vmem:[%s670] sm:$0xf]
        %v672 = vld [vmem:[%s670 + $0x4] sm:$0xf]
        %v673 = vld [vmem:[%s670 + $0x8] sm:$0xf]
        %v674 = vld [vmem:[%s670 + $0xc] sm:$0xf]
        %s675 = scalar_lea.vmem %s1, 8
        %v676 = vld [vmem:[%s675] sm:$0x1]
        %s677 = scalar_lea.vmem %s1, 9
        %v678 = vld [vmem:[%s677] sm:$0x1]
        %s679 = scalar_lea.vmem %s2, 176
        %v680 = vld [vmem:[%s679] sm:$0xf]
        %v681 = vld [vmem:[%s679 + $0x4] sm:$0xf]
        %v682 = vld [vmem:[%s679 + $0x8] sm:$0xf]
        %v683 = vld [vmem:[%s679 + $0xc] sm:$0xf]
        %s684 = scalar_lea.vmem %s2, 192
        %v685 = vld [vmem:[%s684] sm:$0xf]
        %v686 = vld [vmem:[%s684 + $0x4] sm:$0xf]
        %v687 = vld [vmem:[%s684 + $0x8] sm:$0xf]
        %v688 = vld [vmem:[%s684 + $0xc] sm:$0xf]
        %s689 = scalar_lea.vmem %s2, 208
        %v690 = vld [vmem:[%s689] sm:$0xf]
        %v691 = vld [vmem:[%s689 + $0x4] sm:$0xf]
        %v692 = vld [vmem:[%s689 + $0x8] sm:$0xf]
        %v693 = vld [vmem:[%s689 + $0xc] sm:$0xf]
        %s694 = scalar_lea.vmem %s2, 224
        %v695 = vld [vmem:[%s694] sm:$0xf]
        %v696 = vld [vmem:[%s694 + $0x4] sm:$0xf]
        %v697 = vld [vmem:[%s694 + $0x8] sm:$0xf]
        %v698 = vld [vmem:[%s694 + $0xc] sm:$0xf]
        %s699 = scalar_lea.vmem %s1, 10
        %v700 = vld [vmem:[%s699] sm:$0x1]
        %s701 = scalar_lea.vmem %s2, 240
        %v702 = vld [vmem:[%s701] sm:$0xf]
        %v703 = vld [vmem:[%s701 + $0x4] sm:$0xf]
        %v704 = vld [vmem:[%s701 + $0x8] sm:$0xf]
        %v705 = vld [vmem:[%s701 + $0xc] sm:$0xf]
        %s706 = scalar_lea.vmem %s1, 11
        %v707 = vld [vmem:[%s706] sm:$0x1]
        %s708 = scalar_lea.vmem %s2, 256
        %v709 = vld [vmem:[%s708] sm:$0xf]
        %v710 = vld [vmem:[%s708 + $0x4] sm:$0xf]
        %v711 = vld [vmem:[%s708 + $0x8] sm:$0xf]
        %v712 = vld [vmem:[%s708 + $0xc] sm:$0xf]
        %s713 = scalar_lea.vmem %s1, 12
        %v714 = vld [vmem:[%s713] sm:$0x1]
        %v715 = vmul.u32 %v234, 2
        %vm716 = vcmp.eq.s32.totalorder %v237, %v715
        %v717 = vadd.s32 %v715, 1
        %vm718 = vcmp.eq.s32.totalorder %v237, %v717
        %vm719 = vmor %vm716, %vm718
        %v720 = vsel %vm719, 1, 0
        %v721 = vcvt.s32.f32 %v720
        %v722 = vmul.f32 %v721, 0.5
        %v724 = vsel %vm246, %v722, 0
        %726 = vmatpush.msra.mxu0 0.0
        %727 = vmatpush.msra.mxu0 0.0
        %728 = vmatpush.msra.mxu0 0.0
        %729 = vmatpush.msra.mxu0 0.0
        %730 = vmatpush.msra.mxu0 0.0
        %731 = vmatpush.msra.mxu0 0.0
        %732 = vmatpush.msra.mxu0 0.0
        %733 = vmatpush.msra.mxu0 0.0
        %734 = vmatpush.msra.mxu0 0.0
        %735 = vmatpush.msra.mxu0 0.0
        %736 = vmatpush.msra.mxu0 0.0
        %737 = vmatpush.msra.mxu0 0.0
        %738 = vmatpush.msra.mxu0 0.0
        %739 = vmatpush.msra.mxu0 0.0
        %740 = vmatpush.msra.mxu0 %v655
        %741 = vmatpush.msra.mxu0 %v654
        %742 = vmatmul.f32.gmra.mxu0 %v724
        %v743 = vpop.f32.mrf.mxu0
        %v744 = vadd.f32 0.0, %v743
        %745 = vdwg.mxu0
        %v746 = vpack.c.bf16 %v744, %v744
        %v748 = vperm.slane %v714, 0
        %v754 = vunpack.c.l.b16 %v709
        %v755 = vunpack.c.l.b16 %v710
        %v756 = vunpack.c.l.b16 %v711
        %v757 = vunpack.c.l.b16 %v712
        %v758 = vpack.c.b16 %v755, %v754
        %v759 = vpack.c.b16 %v757, %v756
        %v763 = vsel %vm290, %v746, 0
        %765 = vmatpush.bf16.msra.mxu0 0
        %766 = vmatpush.bf16.msra.mxu0 0
        %767 = vmatpush.bf16.msra.mxu0 0
        %768 = vmatpush.bf16.msra.mxu0 0
        %769 = vmatpush.bf16.msra.mxu0 0
        %770 = vmatpush.bf16.msra.mxu0 0
        %771 = vmatpush.bf16.msra.mxu0 %v759
        %772 = vmatpush.bf16.msra.mxu0 %v758
        %773 = vmatmul.bf16.gmra.mxu0 %v763
        %v774 = vpop.f32.mrf.mxu0
        %v775 = vadd.f32 %v748, %v774
        %v776 = vpop.f32.mrf.mxu0
        %777 = vdwg.mxu0
        %v779 = vperm.slane %v657, 0
        %v781 = vmul.f32 %v654, %v779
        %v782 = vmul.f32 %v655, %v779
        %v784 = vperm.slane %v659, 0
        %v786 = vadd.f32 %v781, %v784
        %v787 = vadd.f32 %v782, %v784
        %v788 = vmax.f32 %v786, 0.0
        %v789 = vmax.f32 %v787, 0.0
        %790 = vmatpush.msra.mxu0 0.0
        %791 = vmatpush.msra.mxu0 0.0
        %792 = vmatpush.msra.mxu0 0.0
        %793 = vmatpush.msra.mxu0 0.0
        %794 = vmatpush.msra.mxu0 0.0
        %795 = vmatpush.msra.mxu0 0.0
        %796 = vmatpush.msra.mxu0 0.0
        %797 = vmatpush.msra.mxu0 0.0
        %798 = vmatpush.msra.mxu0 0.0
        %799 = vmatpush.msra.mxu0 0.0
        %800 = vmatpush.msra.mxu0 0.0
        %801 = vmatpush.msra.mxu0 0.0
        %802 = vmatpush.msra.mxu0 0.0
        %803 = vmatpush.msra.mxu0 0.0
        %804 = vmatpush.msra.mxu0 %v789
        %805 = vmatpush.msra.mxu0 %v788
        %806 = vmatmul.f32.gmra.mxu0 %v248
        %v807 = vpop.f32.mrf.mxu0
        %v808 = vadd.f32 0.0, %v807
        %809 = vmatmul.f32.gmra.mxu0 %v251
        %v810 = vpop.f32.mrf.mxu0
        %v811 = vadd.f32 0.0, %v810
        %812 = vdwg.mxu0
        %v813 = vpack.c.bf16 %v811, %v808
        %v814 = vpack.c.bf16 %v789, %v788
        %v819 = vunpack.c.l.b16 %v666
        %v820 = vunpack.c.l.b16 %v667
        %v821 = vunpack.c.l.b16 %v668
        %v822 = vunpack.c.l.b16 %v669
        %v823 = vpack.c.b16 %v820, %v819
        %v824 = vpack.c.b16 %v822, %v821
        %v828 = vsel %vm290, %v814, 0
        %830 = vmatpush.bf16.msra.mxu0 0
        %831 = vmatpush.bf16.msra.mxu0 0
        %832 = vmatpush.bf16.msra.mxu0 0
        %833 = vmatpush.bf16.msra.mxu0 0
        %834 = vmatpush.bf16.msra.mxu0 0
        %835 = vmatpush.bf16.msra.mxu0 0
        %836 = vmatpush.bf16.msra.mxu0 %v824
        %837 = vmatpush.bf16.msra.mxu0 %v823
        %838 = vmatmul.bf16.gmra.mxu0 %v828
        %v839 = vpop.f32.mrf.mxu0
        %v840 = vadd.f32 0.0, %v839
        %v841 = vpop.f32.mrf.mxu0
        %v842 = vadd.f32 0.0, %v841
        %843 = vdwg.mxu0
        %v848 = vunpack.c.l.b16 %v661
        %v849 = vunpack.c.l.b16 %v662
        %v850 = vunpack.c.l.b16 %v663
        %v851 = vunpack.c.l.b16 %v664
        %v852 = vpack.c.b16 %v849, %v848
        %v853 = vpack.c.b16 %v851, %v850
        %v857 = vsel %vm290, %v813, 0
        %859 = vmatpush.bf16.msra.mxu0 0
        %860 = vmatpush.bf16.msra.mxu0 0
        %861 = vmatpush.bf16.msra.mxu0 0
        %862 = vmatpush.bf16.msra.mxu0 0
        %863 = vmatpush.bf16.msra.mxu0 0
        %864 = vmatpush.bf16.msra.mxu0 0
        %865 = vmatpush.bf16.msra.mxu0 %v853
        %866 = vmatpush.bf16.msra.mxu0 %v852
        %867 = vmatmul.bf16.gmra.mxu0 %v857
        %v868 = vpop.f32.mrf.mxu0
        %v869 = vadd.f32 %v840, %v868
        %v870 = vpop.f32.mrf.mxu0
        %v871 = vadd.f32 %v842, %v870
        %872 = vdwg.mxu0
        %873 = vmatpush.msra.mxu0 0.0
        %874 = vmatpush.msra.mxu0 0.0
        %875 = vmatpush.msra.mxu0 0.0
        %876 = vmatpush.msra.mxu0 0.0
        %877 = vmatpush.msra.mxu0 0.0
        %878 = vmatpush.msra.mxu0 0.0
        %879 = vmatpush.msra.mxu0 0.0
        %880 = vmatpush.msra.mxu0 0.0
        %881 = vmatpush.msra.mxu0 0.0
        %882 = vmatpush.msra.mxu0 0.0
        %883 = vmatpush.msra.mxu0 0.0
        %884 = vmatpush.msra.mxu0 0.0
        %885 = vmatpush.msra.mxu0 0.0
        %886 = vmatpush.msra.mxu0 0.0
        %887 = vmatpush.msra.mxu0 %v789
        %888 = vmatpush.msra.mxu0 %v788
        %889 = vmatmul.f32.gmra.mxu0 %v346
        %v890 = vpop.f32.mrf.mxu0
        %v891 = vadd.f32 0.0, %v890
        %892 = vmatmul.f32.gmra.mxu0 %v349
        %v893 = vpop.f32.mrf.mxu0
        %v894 = vadd.f32 0.0, %v893
        %895 = vdwg.mxu0
        %v896 = vpack.c.bf16 %v894, %v891
        %v901 = vunpack.c.l.b16 %v671
        %v902 = vunpack.c.l.b16 %v672
        %v903 = vunpack.c.l.b16 %v673
        %v904 = vunpack.c.l.b16 %v674
        %v905 = vpack.c.b16 %v902, %v901
        %v906 = vpack.c.b16 %v904, %v903
        %v910 = vsel %vm290, %v896, 0
        %912 = vmatpush.bf16.msra.mxu0 0
        %913 = vmatpush.bf16.msra.mxu0 0
        %914 = vmatpush.bf16.msra.mxu0 0
        %915 = vmatpush.bf16.msra.mxu0 0
        %916 = vmatpush.bf16.msra.mxu0 0
        %917 = vmatpush.bf16.msra.mxu0 0
        %918 = vmatpush.bf16.msra.mxu0 %v906
        %919 = vmatpush.bf16.msra.mxu0 %v905
        %920 = vmatmul.bf16.gmra.mxu0 %v910
        %v921 = vpop.f32.mrf.mxu0
        %v922 = vadd.f32 0.0, %v921
        %v923 = vpop.f32.mrf.mxu0
        %v924 = vadd.f32 0.0, %v923
        %925 = vdwg.mxu0
        %v926 = vadd.f32 %v869, %v922
        %v927 = vadd.f32 %v871, %v924
        %v929 = vperm.slane %v676, 0
        %v931 = vmul.f32 %v926, %v929
        %v932 = vmul.f32 %v927, %v929
        %v934 = vperm.slane %v678, 0
        %v936 = vadd.f32 %v931, %v934
        %v937 = vadd.f32 %v932, %v934
        %v938 = vmax.f32 %v936, 0.0
        %v939 = vmax.f32 %v937, 0.0
        %v940 = vadd.s32 %v715, 4294967295
        %vm941 = vcmp.eq.s32.totalorder %v237, %v940
        %v942 = vsel %vm941, 1, 0
        %v943 = vcvt.s32.f32 %v942
        %v945 = vsel %vm246, %v943, 0
        %947 = vmatpush.msra.mxu0 0.0
        %948 = vmatpush.msra.mxu0 0.0
        %949 = vmatpush.msra.mxu0 0.0
        %950 = vmatpush.msra.mxu0 0.0
        %951 = vmatpush.msra.mxu0 0.0
        %952 = vmatpush.msra.mxu0 0.0
        %953 = vmatpush.msra.mxu0 0.0
        %954 = vmatpush.msra.mxu0 0.0
        %955 = vmatpush.msra.mxu0 0.0
        %956 = vmatpush.msra.mxu0 0.0
        %957 = vmatpush.msra.mxu0 0.0
        %958 = vmatpush.msra.mxu0 0.0
        %959 = vmatpush.msra.mxu0 0.0
        %960 = vmatpush.msra.mxu0 0.0
        %961 = vmatpush.msra.mxu0 %v939
        %962 = vmatpush.msra.mxu0 %v938
        %963 = vmatmul.f32.gmra.mxu0 %v945
        %v964 = vpop.f32.mrf.mxu0
        %v965 = vadd.f32 0.0, %v964
        %966 = vdwg.mxu0
        %v967 = vpack.c.bf16 %v965, %v965
        %v968 = vsel %vm716, 1, 0
        %v969 = vcvt.s32.f32 %v968
        %v971 = vsel %vm246, %v969, 0
        %973 = vmatpush.msra.mxu0 0.0
        %974 = vmatpush.msra.mxu0 0.0
        %975 = vmatpush.msra.mxu0 0.0
        %976 = vmatpush.msra.mxu0 0.0
        %977 = vmatpush.msra.mxu0 0.0
        %978 = vmatpush.msra.mxu0 0.0
        %979 = vmatpush.msra.mxu0 0.0
        %980 = vmatpush.msra.mxu0 0.0
        %981 = vmatpush.msra.mxu0 0.0
        %982 = vmatpush.msra.mxu0 0.0
        %983 = vmatpush.msra.mxu0 0.0
        %984 = vmatpush.msra.mxu0 0.0
        %985 = vmatpush.msra.mxu0 0.0
        %986 = vmatpush.msra.mxu0 0.0
        %987 = vmatpush.msra.mxu0 %v939
        %988 = vmatpush.msra.mxu0 %v938
        %989 = vmatmul.f32.gmra.mxu0 %v971
        %v990 = vpop.f32.mrf.mxu0
        %v991 = vadd.f32 0.0, %v990
        %992 = vdwg.mxu0
        %v993 = vpack.c.bf16 %v991, %v991
        %v998 = vunpack.c.l.b16 %v685
        %v999 = vunpack.c.l.b16 %v686
        %v1000 = vunpack.c.l.b16 %v687
        %v1001 = vunpack.c.l.b16 %v688
        %v1002 = vpack.c.b16 %v999, %v998
        %v1003 = vpack.c.b16 %v1001, %v1000
        %v1007 = vsel %vm290, %v993, 0
        %1009 = vmatpush.bf16.msra.mxu0 0
        %1010 = vmatpush.bf16.msra.mxu0 0
        %1011 = vmatpush.bf16.msra.mxu0 0
        %1012 = vmatpush.bf16.msra.mxu0 0
        %1013 = vmatpush.bf16.msra.mxu0 0
        %1014 = vmatpush.bf16.msra.mxu0 0
        %1015 = vmatpush.bf16.msra.mxu0 %v1003
        %1016 = vmatpush.bf16.msra.mxu0 %v1002
        %1017 = vmatmul.bf16.gmra.mxu0 %v1007
        %v1018 = vpop.f32.mrf.mxu0
        %v1019 = vadd.f32 0.0, %v1018
        %v1020 = vpop.f32.mrf.mxu0
        %1021 = vdwg.mxu0
        %v1026 = vunpack.c.l.b16 %v680
        %v1027 = vunpack.c.l.b16 %v681
        %v1028 = vunpack.c.l.b16 %v682
        %v1029 = vunpack.c.l.b16 %v683
        %v1030 = vpack.c.b16 %v1027, %v1026
        %v1031 = vpack.c.b16 %v1029, %v1028
        %v1035 = vsel %vm290, %v967, 0
        %1037 = vmatpush.bf16.msra.mxu0 0
        %1038 = vmatpush.bf16.msra.mxu0 0
        %1039 = vmatpush.bf16.msra.mxu0 0
        %1040 = vmatpush.bf16.msra.mxu0 0
        %1041 = vmatpush.bf16.msra.mxu0 0
        %1042 = vmatpush.bf16.msra.mxu0 0
        %1043 = vmatpush.bf16.msra.mxu0 %v1031
        %1044 = vmatpush.bf16.msra.mxu0 %v1030
        %1045 = vmatmul.bf16.gmra.mxu0 %v1035
        %v1046 = vpop.f32.mrf.mxu0
        %v1047 = vadd.f32 %v1019, %v1046
        %v1048 = vpop.f32.mrf.mxu0
        %1049 = vdwg.mxu0
        %v1050 = vsel %vm718, 1, 0
        %v1051 = vcvt.s32.f32 %v1050
        %v1053 = vsel %vm246, %v1051, 0
        %1055 = vmatpush.msra.mxu0 0.0
        %1056 = vmatpush.msra.mxu0 0.0
        %1057 = vmatpush.msra.mxu0 0.0
        %1058 = vmatpush.msra.mxu0 0.0
        %1059 = vmatpush.msra.mxu0 0.0
        %1060 = vmatpush.msra.mxu0 0.0
        %1061 = vmatpush.msra.mxu0 0.0
        %1062 = vmatpush.msra.mxu0 0.0
        %1063 = vmatpush.msra.mxu0 0.0
        %1064 = vmatpush.msra.mxu0 0.0
        %1065 = vmatpush.msra.mxu0 0.0
        %1066 = vmatpush.msra.mxu0 0.0
        %1067 = vmatpush.msra.mxu0 0.0
        %1068 = vmatpush.msra.mxu0 0.0
        %1069 = vmatpush.msra.mxu0 %v939
        %1070 = vmatpush.msra.mxu0 %v938
        %1071 = vmatmul.f32.gmra.mxu0 %v1053
        %v1072 = vpop.f32.mrf.mxu0
        %v1073 = vadd.f32 0.0, %v1072
        %1074 = vdwg.mxu0
        %v1075 = vpack.c.bf16 %v1073, %v1073
        %v1080 = vunpack.c.l.b16 %v690
        %v1081 = vunpack.c.l.b16 %v691
        %v1082 = vunpack.c.l.b16 %v692
        %v1083 = vunpack.c.l.b16 %v693
        %v1084 = vpack.c.b16 %v1081, %v1080
        %v1085 = vpack.c.b16 %v1083, %v1082
        %v1089 = vsel %vm290, %v1075, 0
        %1091 = vmatpush.bf16.msra.mxu0 0
        %1092 = vmatpush.bf16.msra.mxu0 0
        %1093 = vmatpush.bf16.msra.mxu0 0
        %1094 = vmatpush.bf16.msra.mxu0 0
        %1095 = vmatpush.bf16.msra.mxu0 0
        %1096 = vmatpush.bf16.msra.mxu0 0
        %1097 = vmatpush.bf16.msra.mxu0 %v1085
        %1098 = vmatpush.bf16.msra.mxu0 %v1084
        %1099 = vmatmul.bf16.gmra.mxu0 %v1089
        %v1100 = vpop.f32.mrf.mxu0
        %v1101 = vadd.f32 0.0, %v1100
        %v1102 = vpop.f32.mrf.mxu0
        %1103 = vdwg.mxu0
        %v1104 = vadd.f32 %v1047, %v1101
        %v1105 = vsel %vm290, %v1104, 0.0
        %v1106 = vrot.slane %v1105, 4
        %v1107 = vadd.f32 %v1105, %v1106
        %v1108 = vrot.slane %v1107, 2
        %v1109 = vadd.f32 %v1107, %v1108
        %v1110 = vrot.slane %v1109, 1
        %v1111 = vadd.f32 %v1109, %v1110
        %v1112 = vrcp.pop 8.0
        %v1113 = vmul.f32 8.0, %v1112
        %v1114 = vsub.f32 1.0, %v1113
        %v1115 = vmul.f32 %v1112, %v1114
        %v1116 = vadd.f32 %v1112, %v1115
        %vm1117 = vweird.f32 %v1112
        %v1118 = vsel %vm1117, %v1112, %v1116
        %v1119 = vmul.f32 %v1111, %v1118
        %v1120 = vpack.c.bf16 %v1119, %v1119
        %v1125 = vunpack.c.l.b16 %v695
        %v1126 = vunpack.c.l.b16 %v696
        %v1127 = vunpack.c.l.b16 %v697
        %v1128 = vunpack.c.l.b16 %v698
        %v1129 = vpack.c.b16 %v1126, %v1125
        %v1130 = vpack.c.b16 %v1128, %v1127
        %v1134 = vsel %vm290, %v1120, 0
        %1136 = vmatpush.bf16.msra.mxu0 0
        %1137 = vmatpush.bf16.msra.mxu0 0
        %1138 = vmatpush.bf16.msra.mxu0 0
        %1139 = vmatpush.bf16.msra.mxu0 0
        %1140 = vmatpush.bf16.msra.mxu0 0
        %1141 = vmatpush.bf16.msra.mxu0 0
        %1142 = vmatpush.bf16.msra.mxu0 %v1130
        %1143 = vmatpush.bf16.msra.mxu0 %v1129
        %1144 = vmatmul.bf16.gmra.mxu0 %v1134
        %v1145 = vpop.f32.mrf.mxu0
        %v1146 = vadd.f32 %v700, %v1145
        %v1147 = vpop.f32.mrf.mxu0
        %1148 = vdwg.mxu0
        %v1149 = vmax.f32 %v1146, 0.0
        %v1150 = vpack.c.bf16 %v1149, %v1149
        %v1155 = vunpack.c.l.b16 %v702
        %v1156 = vunpack.c.l.b16 %v703
        %v1157 = vunpack.c.l.b16 %v704
        %v1158 = vunpack.c.l.b16 %v705
        %v1159 = vpack.c.b16 %v1156, %v1155
        %v1160 = vpack.c.b16 %v1158, %v1157
        %v1164 = vsel %vm290, %v1150, 0
        %1166 = vmatpush.bf16.msra.mxu0 0
        %1167 = vmatpush.bf16.msra.mxu0 0
        %1168 = vmatpush.bf16.msra.mxu0 0
        %1169 = vmatpush.bf16.msra.mxu0 0
        %1170 = vmatpush.bf16.msra.mxu0 0
        %1171 = vmatpush.bf16.msra.mxu0 0
        %1172 = vmatpush.bf16.msra.mxu0 %v1160
        %1173 = vmatpush.bf16.msra.mxu0 %v1159
        %1174 = vmatmul.bf16.gmra.mxu0 %v1164
        %v1175 = vpop.f32.mrf.mxu0
        %v1176 = vadd.f32 %v707, %v1175
        %v1177 = vpop.f32.mrf.mxu0
        %1178 = vdwg.mxu0
        %v1179 = vsub.f32 0.0, %v1176
        %v1180 = vmul.f32 %v1179, 1.442695
        %v1181 = vpow.pop %v1180
        %v1182 = vadd.f32 %v1181, 1.0
        %v1183 = vrcp.pop %v1182
        %v1184 = vmul.f32 %v1182, %v1183
        %v1185 = vsub.f32 1.0, %v1184
        %v1186 = vmul.f32 %v1183, %v1185
        %v1187 = vadd.f32 %v1183, %v1186
        %vm1188 = vweird.f32 %v1182
        %vm1189 = vweird.f32 %v1183
        %vm1190 = vmor %vm1188, %vm1189
        %v1191 = vsel %vm1190, %v1183, %v1187
        %v1192 = vand.u32 2147483647, %v1182
        %vm1193 = vcmp.eq.f32.partialorder %v1192, 8.507059e+37
        %v1194 = vand.u32 %v1182, 2147483648
        %v1195 = vor.u32 1.1754944e-38, %v1194
        %v1196 = vsel %vm1193, %v1195, %v1191
        %v1197 = vmul.f32 1.0, %v1196
        %v1198 = vperm.slane %v1197, 0
        %v1199 = vmul.f32 %v1104, %v1198
        %v1200 = vadd.f32 %v1199, %v775
        %s1201 = scalar_lea.vmem %s1, 13
        %v1202 = vld [vmem:[%s1201] sm:$0x1]
        %s1203 = scalar_lea.vmem %s1, 14
        %v1204 = vld [vmem:[%s1203] sm:$0x1]
        %s1205 = scalar_lea.vmem %s2, 272
        %v1206 = vld [vmem:[%s1205] sm:$0xf]
        %v1207 = vld [vmem:[%s1205 + $0x4] sm:$0xf]
        %v1208 = vld [vmem:[%s1205 + $0x8] sm:$0xf]
        %v1209 = vld [vmem:[%s1205 + $0xc] sm:$0xf]
        %s1210 = scalar_lea.vmem %s2, 288
        %v1211 = vld [vmem:[%s1210] sm:$0xf]
        %v1212 = vld [vmem:[%s1210 + $0x4] sm:$0xf]
        %v1213 = vld [vmem:[%s1210 + $0x8] sm:$0xf]
        %v1214 = vld [vmem:[%s1210 + $0xc] sm:$0xf]
        %s1215 = scalar_lea.vmem %s2, 304
        %v1216 = vld [vmem:[%s1215] sm:$0xf]
        %v1217 = vld [vmem:[%s1215 + $0x4] sm:$0xf]
        %v1218 = vld [vmem:[%s1215 + $0x8] sm:$0xf]
        %v1219 = vld [vmem:[%s1215 + $0xc] sm:$0xf]
        %s1220 = scalar_lea.vmem %s1, 15
        %v1221 = vld [vmem:[%s1220] sm:$0x1]
        %s1222 = scalar_lea.vmem %s1, 16
        %v1223 = vld [vmem:[%s1222] sm:$0x1]
        %s1224 = scalar_lea.vmem %s2, 320
        %v1225 = vld [vmem:[%s1224] sm:$0xf]
        %v1226 = vld [vmem:[%s1224 + $0x4] sm:$0xf]
        %v1227 = vld [vmem:[%s1224 + $0x8] sm:$0xf]
        %v1228 = vld [vmem:[%s1224 + $0xc] sm:$0xf]
        %s1229 = scalar_lea.vmem %s2, 336
        %v1230 = vld [vmem:[%s1229] sm:$0xf]
        %v1231 = vld [vmem:[%s1229 + $0x4] sm:$0xf]
        %v1232 = vld [vmem:[%s1229 + $0x8] sm:$0xf]
        %v1233 = vld [vmem:[%s1229 + $0xc] sm:$0xf]
        %s1234 = scalar_lea.vmem %s2, 352
        %v1235 = vld [vmem:[%s1234] sm:$0xf]
        %v1236 = vld [vmem:[%s1234 + $0x4] sm:$0xf]
        %v1237 = vld [vmem:[%s1234 + $0x8] sm:$0xf]
        %v1238 = vld [vmem:[%s1234 + $0xc] sm:$0xf]
        %s1239 = scalar_lea.vmem %s2, 368
        %v1240 = vld [vmem:[%s1239] sm:$0xf]
        %v1241 = vld [vmem:[%s1239 + $0x4] sm:$0xf]
        %v1242 = vld [vmem:[%s1239 + $0x8] sm:$0xf]
        %v1243 = vld [vmem:[%s1239 + $0xc] sm:$0xf]
        %s1244 = scalar_lea.vmem %s1, 17
        %v1245 = vld [vmem:[%s1244] sm:$0x1]
        %s1246 = scalar_lea.vmem %s2, 384
        %v1247 = vld [vmem:[%s1246] sm:$0xf]
        %v1248 = vld [vmem:[%s1246 + $0x4] sm:$0xf]
        %v1249 = vld [vmem:[%s1246 + $0x8] sm:$0xf]
        %v1250 = vld [vmem:[%s1246 + $0xc] sm:$0xf]
        %s1251 = scalar_lea.vmem %s1, 18
        %v1252 = vld [vmem:[%s1251] sm:$0x1]
        %v1254 = vperm.slane %v1202, 0
        %v1256 = vmul.f32 %v1200, %v1254
        %v1258 = vperm.slane %v1204, 0
        %v1260 = vadd.f32 %v1256, %v1258
        %v1261 = vmax.f32 %v1260, 0.0
        %vm1262 = vcmask 64512
        %v1263 = vsel %vm1262, %v244, 0
        %1265 = vmatpush.msra.mxu0 0.0
        %1266 = vmatpush.msra.mxu0 0.0
        %1267 = vmatpush.msra.mxu0 0.0
        %1268 = vmatpush.msra.mxu0 0.0
        %1269 = vmatpush.msra.mxu0 0.0
        %1270 = vmatpush.msra.mxu0 0.0
        %1271 = vmatpush.msra.mxu0 0.0
        %1272 = vmatpush.msra.mxu0 0.0
        %1273 = vmatpush.msra.mxu0 0.0
        %1274 = vmatpush.msra.mxu0 0.0
        %1275 = vmatpush.msra.mxu0 0.0
        %1276 = vmatpush.msra.mxu0 0.0
        %1277 = vmatpush.msra.mxu0 0.0
        %1278 = vmatpush.msra.mxu0 0.0
        %1279 = vmatpush.msra.mxu0 0.0
        %1280 = vmatpush.msra.mxu0 %v1261
        %1281 = vmatmul.f32.gmra.mxu0 %v1263
        %v1282 = vpop.f32.mrf.mxu0
        %v1283 = vadd.f32 0.0, %v1282
        %1284 = vdwg.mxu0
        %v1285 = vpack.c.bf16 %v1283, %v1283
        %v1286 = vpack.c.bf16 %v1261, %v1261
        %v1291 = vunpack.c.l.b16 %v1211
        %v1292 = vunpack.c.l.b16 %v1212
        %v1293 = vunpack.c.l.b16 %v1213
        %v1294 = vunpack.c.l.b16 %v1214
        %v1295 = vpack.c.b16 %v1292, %v1291
        %v1296 = vpack.c.b16 %v1294, %v1293
        %v1300 = vsel %vm290, %v1286, 0
        %1302 = vmatpush.bf16.msra.mxu0 0
        %1303 = vmatpush.bf16.msra.mxu0 0
        %1304 = vmatpush.bf16.msra.mxu0 0
        %1305 = vmatpush.bf16.msra.mxu0 0
        %1306 = vmatpush.bf16.msra.mxu0 0
        %1307 = vmatpush.bf16.msra.mxu0 0
        %1308 = vmatpush.bf16.msra.mxu0 %v1296
        %1309 = vmatpush.bf16.msra.mxu0 %v1295
        %1310 = vmatmul.bf16.gmra.mxu0 %v1300
        %v1311 = vpop.f32.mrf.mxu0
        %v1312 = vadd.f32 0.0, %v1311
        %v1313 = vpop.f32.mrf.mxu0
        %1314 = vdwg.mxu0
        %v1319 = vunpack.c.l.b16 %v1206
        %v1320 = vunpack.c.l.b16 %v1207
        %v1321 = vunpack.c.l.b16 %v1208
        %v1322 = vunpack.c.l.b16 %v1209
        %v1323 = vpack.c.b16 %v1320, %v1319
        %v1324 = vpack.c.b16 %v1322, %v1321
        %v1328 = vsel %vm290, %v1285, 0
        %1330 = vmatpush.bf16.msra.mxu0 0
        %1331 = vmatpush.bf16.msra.mxu0 0
        %1332 = vmatpush.bf16.msra.mxu0 0
        %1333 = vmatpush.bf16.msra.mxu0 0
        %1334 = vmatpush.bf16.msra.mxu0 0
        %1335 = vmatpush.bf16.msra.mxu0 0
        %1336 = vmatpush.bf16.msra.mxu0 %v1324
        %1337 = vmatpush.bf16.msra.mxu0 %v1323
        %1338 = vmatmul.bf16.gmra.mxu0 %v1328
        %v1339 = vpop.f32.mrf.mxu0
        %v1340 = vadd.f32 %v1312, %v1339
        %v1341 = vpop.f32.mrf.mxu0
        %1342 = vdwg.mxu0
        %v1343 = vsel %vm1262, %v343, 0
        %1345 = vmatpush.msra.mxu0 0.0
        %1346 = vmatpush.msra.mxu0 0.0
        %1347 = vmatpush.msra.mxu0 0.0
        %1348 = vmatpush.msra.mxu0 0.0
        %1349 = vmatpush.msra.mxu0 0.0
        %1350 = vmatpush.msra.mxu0 0.0
        %1351 = vmatpush.msra.mxu0 0.0
        %1352 = vmatpush.msra.mxu0 0.0
        %1353 = vmatpush.msra.mxu0 0.0
        %1354 = vmatpush.msra.mxu0 0.0
        %1355 = vmatpush.msra.mxu0 0.0
        %1356 = vmatpush.msra.mxu0 0.0
        %1357 = vmatpush.msra.mxu0 0.0
        %1358 = vmatpush.msra.mxu0 0.0
        %1359 = vmatpush.msra.mxu0 0.0
        %1360 = vmatpush.msra.mxu0 %v1261
        %1361 = vmatmul.f32.gmra.mxu0 %v1343
        %v1362 = vpop.f32.mrf.mxu0
        %v1363 = vadd.f32 0.0, %v1362
        %1364 = vdwg.mxu0
        %v1365 = vpack.c.bf16 %v1363, %v1363
        %v1370 = vunpack.c.l.b16 %v1216
        %v1371 = vunpack.c.l.b16 %v1217
        %v1372 = vunpack.c.l.b16 %v1218
        %v1373 = vunpack.c.l.b16 %v1219
        %v1374 = vpack.c.b16 %v1371, %v1370
        %v1375 = vpack.c.b16 %v1373, %v1372
        %v1379 = vsel %vm290, %v1365, 0
        %1381 = vmatpush.bf16.msra.mxu0 0
        %1382 = vmatpush.bf16.msra.mxu0 0
        %1383 = vmatpush.bf16.msra.mxu0 0
        %1384 = vmatpush.bf16.msra.mxu0 0
        %1385 = vmatpush.bf16.msra.mxu0 0
        %1386 = vmatpush.bf16.msra.mxu0 0
        %1387 = vmatpush.bf16.msra.mxu0 %v1375
        %1388 = vmatpush.bf16.msra.mxu0 %v1374
        %1389 = vmatmul.bf16.gmra.mxu0 %v1379
        %v1390 = vpop.f32.mrf.mxu0
        %v1391 = vadd.f32 0.0, %v1390
        %v1392 = vpop.f32.mrf.mxu0
        %1393 = vdwg.mxu0
        %v1394 = vadd.f32 %v1340, %v1391
        %v1396 = vperm.slane %v1221, 0
        %v1398 = vmul.f32 %v1394, %v1396
        %v1400 = vperm.slane %v1223, 0
        %v1402 = vadd.f32 %v1398, %v1400
        %v1403 = vmax.f32 %v1402, 0.0
        %1404 = vmatpush.msra.mxu0 0.0
        %1405 = vmatpush.msra.mxu0 0.0
        %1406 = vmatpush.msra.mxu0 0.0
        %1407 = vmatpush.msra.mxu0 0.0
        %1408 = vmatpush.msra.mxu0 0.0
        %1409 = vmatpush.msra.mxu0 0.0
        %1410 = vmatpush.msra.mxu0 0.0
        %1411 = vmatpush.msra.mxu0 0.0
        %1412 = vmatpush.msra.mxu0 0.0
        %1413 = vmatpush.msra.mxu0 0.0
        %1414 = vmatpush.msra.mxu0 0.0
        %1415 = vmatpush.msra.mxu0 0.0
        %1416 = vmatpush.msra.mxu0 0.0
        %1417 = vmatpush.msra.mxu0 0.0
        %1418 = vmatpush.msra.mxu0 0.0
        %1419 = vmatpush.msra.mxu0 %v1403
        %1420 = vmatmul.f32.gmra.mxu0 %v1263
        %v1421 = vpop.f32.mrf.mxu0
        %v1422 = vadd.f32 0.0, %v1421
        %1423 = vdwg.mxu0
        %v1424 = vpack.c.bf16 %v1422, %v1422
        %v1425 = vpack.c.bf16 %v1403, %v1403
        %v1430 = vunpack.c.l.b16 %v1230
        %v1431 = vunpack.c.l.b16 %v1231
        %v1432 = vunpack.c.l.b16 %v1232
        %v1433 = vunpack.c.l.b16 %v1233
        %v1434 = vpack.c.b16 %v1431, %v1430
        %v1435 = vpack.c.b16 %v1433, %v1432
        %v1439 = vsel %vm290, %v1425, 0
        %1441 = vmatpush.bf16.msra.mxu0 0
        %1442 = vmatpush.bf16.msra.mxu0 0
        %1443 = vmatpush.bf16.msra.mxu0 0
        %1444 = vmatpush.bf16.msra.mxu0 0
        %1445 = vmatpush.bf16.msra.mxu0 0
        %1446 = vmatpush.bf16.msra.mxu0 0
        %1447 = vmatpush.bf16.msra.mxu0 %v1435
        %1448 = vmatpush.bf16.msra.mxu0 %v1434
        %1449 = vmatmul.bf16.gmra.mxu0 %v1439
        %v1450 = vpop.f32.mrf.mxu0
        %v1451 = vadd.f32 0.0, %v1450
        %v1452 = vpop.f32.mrf.mxu0
        %1453 = vdwg.mxu0
        %v1458 = vunpack.c.l.b16 %v1225
        %v1459 = vunpack.c.l.b16 %v1226
        %v1460 = vunpack.c.l.b16 %v1227
        %v1461 = vunpack.c.l.b16 %v1228
        %v1462 = vpack.c.b16 %v1459, %v1458
        %v1463 = vpack.c.b16 %v1461, %v1460
        %v1467 = vsel %vm290, %v1424, 0
        %1469 = vmatpush.bf16.msra.mxu0 0
        %1470 = vmatpush.bf16.msra.mxu0 0
        %1471 = vmatpush.bf16.msra.mxu0 0
        %1472 = vmatpush.bf16.msra.mxu0 0
        %1473 = vmatpush.bf16.msra.mxu0 0
        %1474 = vmatpush.bf16.msra.mxu0 0
        %1475 = vmatpush.bf16.msra.mxu0 %v1463
        %1476 = vmatpush.bf16.msra.mxu0 %v1462
        %1477 = vmatmul.bf16.gmra.mxu0 %v1467
        %v1478 = vpop.f32.mrf.mxu0
        %v1479 = vadd.f32 %v1451, %v1478
        %v1480 = vpop.f32.mrf.mxu0
        %1481 = vdwg.mxu0
        %1482 = vmatpush.msra.mxu0 0.0
        %1483 = vmatpush.msra.mxu0 0.0
        %1484 = vmatpush.msra.mxu0 0.0
        %1485 = vmatpush.msra.mxu0 0.0
        %1486 = vmatpush.msra.mxu0 0.0
        %1487 = vmatpush.msra.mxu0 0.0
        %1488 = vmatpush.msra.mxu0 0.0
        %1489 = vmatpush.msra.mxu0 0.0
        %1490 = vmatpush.msra.mxu0 0.0
        %1491 = vmatpush.msra.mxu0 0.0
        %1492 = vmatpush.msra.mxu0 0.0
        %1493 = vmatpush.msra.mxu0 0.0
        %1494 = vmatpush.msra.mxu0 0.0
        %1495 = vmatpush.msra.mxu0 0.0
        %1496 = vmatpush.msra.mxu0 0.0
        %1497 = vmatpush.msra.mxu0 %v1403
        %1498 = vmatmul.f32.gmra.mxu0 %v1343
        %v1499 = vpop.f32.mrf.mxu0
        %v1500 = vadd.f32 0.0, %v1499
        %1501 = vdwg.mxu0
        %v1502 = vpack.c.bf16 %v1500, %v1500
        %v1507 = vunpack.c.l.b16 %v1235
        %v1508 = vunpack.c.l.b16 %v1236
        %v1509 = vunpack.c.l.b16 %v1237
        %v1510 = vunpack.c.l.b16 %v1238
        %v1511 = vpack.c.b16 %v1508, %v1507
        %v1512 = vpack.c.b16 %v1510, %v1509
        %v1516 = vsel %vm290, %v1502, 0
        %1518 = vmatpush.bf16.msra.mxu0 0
        %1519 = vmatpush.bf16.msra.mxu0 0
        %1520 = vmatpush.bf16.msra.mxu0 0
        %1521 = vmatpush.bf16.msra.mxu0 0
        %1522 = vmatpush.bf16.msra.mxu0 0
        %1523 = vmatpush.bf16.msra.mxu0 0
        %1524 = vmatpush.bf16.msra.mxu0 %v1512
        %1525 = vmatpush.bf16.msra.mxu0 %v1511
        %1526 = vmatmul.bf16.gmra.mxu0 %v1516
        %v1527 = vpop.f32.mrf.mxu0
        %v1528 = vadd.f32 0.0, %v1527
        %v1529 = vpop.f32.mrf.mxu0
        %1530 = vdwg.mxu0
        %v1531 = vadd.f32 %v1479, %v1528
        %v1532 = vsel %vm290, %v1531, 0.0
        %v1533 = vrot.slane %v1532, 4
        %v1534 = vadd.f32 %v1532, %v1533
        %v1535 = vrot.slane %v1534, 2
        %v1536 = vadd.f32 %v1534, %v1535
        %v1537 = vrot.slane %v1536, 1
        %v1538 = vadd.f32 %v1536, %v1537
        %v1539 = vmul.f32 %v1538, %v1118
        %v1540 = vpack.c.bf16 %v1539, %v1539
        %v1545 = vunpack.c.l.b16 %v1240
        %v1546 = vunpack.c.l.b16 %v1241
        %v1547 = vunpack.c.l.b16 %v1242
        %v1548 = vunpack.c.l.b16 %v1243
        %v1549 = vpack.c.b16 %v1546, %v1545
        %v1550 = vpack.c.b16 %v1548, %v1547
        %v1554 = vsel %vm290, %v1540, 0
        %1556 = vmatpush.bf16.msra.mxu0 0
        %1557 = vmatpush.bf16.msra.mxu0 0
        %1558 = vmatpush.bf16.msra.mxu0 0
        %1559 = vmatpush.bf16.msra.mxu0 0
        %1560 = vmatpush.bf16.msra.mxu0 0
        %1561 = vmatpush.bf16.msra.mxu0 0
        %1562 = vmatpush.bf16.msra.mxu0 %v1550
        %1563 = vmatpush.bf16.msra.mxu0 %v1549
        %1564 = vmatmul.bf16.gmra.mxu0 %v1554
        %v1565 = vpop.f32.mrf.mxu0
        %v1566 = vadd.f32 %v1245, %v1565
        %v1567 = vpop.f32.mrf.mxu0
        %1568 = vdwg.mxu0
        %v1569 = vmax.f32 %v1566, 0.0
        %v1570 = vpack.c.bf16 %v1569, %v1569
        %v1575 = vunpack.c.l.b16 %v1247
        %v1576 = vunpack.c.l.b16 %v1248
        %v1577 = vunpack.c.l.b16 %v1249
        %v1578 = vunpack.c.l.b16 %v1250
        %v1579 = vpack.c.b16 %v1576, %v1575
        %v1580 = vpack.c.b16 %v1578, %v1577
        %v1584 = vsel %vm290, %v1570, 0
        %1586 = vmatpush.bf16.msra.mxu0 0
        %1587 = vmatpush.bf16.msra.mxu0 0
        %1588 = vmatpush.bf16.msra.mxu0 0
        %1589 = vmatpush.bf16.msra.mxu0 0
        %1590 = vmatpush.bf16.msra.mxu0 0
        %1591 = vmatpush.bf16.msra.mxu0 0
        %1592 = vmatpush.bf16.msra.mxu0 %v1580
        %1593 = vmatpush.bf16.msra.mxu0 %v1579
        %1594 = vmatmul.bf16.gmra.mxu0 %v1584
        %v1595 = vpop.f32.mrf.mxu0
        %v1596 = vadd.f32 %v1252, %v1595
        %v1597 = vpop.f32.mrf.mxu0
        %1598 = vdwg.mxu0
        %v1599 = vsub.f32 0.0, %v1596
        %v1600 = vmul.f32 %v1599, 1.442695
        %v1601 = vpow.pop %v1600
        %v1602 = vadd.f32 %v1601, 1.0
        %v1603 = vrcp.pop %v1602
        %v1604 = vmul.f32 %v1602, %v1603
        %v1605 = vsub.f32 1.0, %v1604
        %v1606 = vmul.f32 %v1603, %v1605
        %v1607 = vadd.f32 %v1603, %v1606
        %vm1608 = vweird.f32 %v1602
        %vm1609 = vweird.f32 %v1603
        %vm1610 = vmor %vm1608, %vm1609
        %v1611 = vsel %vm1610, %v1603, %v1607
        %v1612 = vand.u32 2147483647, %v1602
        %vm1613 = vcmp.eq.f32.partialorder %v1612, 8.507059e+37
        %v1614 = vand.u32 %v1602, 2147483648
        %v1615 = vor.u32 1.1754944e-38, %v1614
        %v1616 = vsel %vm1613, %v1615, %v1611
        %v1617 = vmul.f32 1.0, %v1616
        %v1618 = vperm.slane %v1617, 0
        %v1619 = vmul.f32 %v1531, %v1618
        %v1620 = vadd.f32 %v1619, %v1200
        %s1621 = scalar_lea.vmem %s1, 19
        %v1622 = vld [vmem:[%s1621] sm:$0x1]
        %s1623 = scalar_lea.vmem %s1, 20
        %v1624 = vld [vmem:[%s1623] sm:$0x1]
        %s1625 = scalar_lea.vmem %s2, 400
        %v1626 = vld [vmem:[%s1625] sm:$0xf]
        %v1627 = vld [vmem:[%s1625 + $0x4] sm:$0xf]
        %v1628 = vld [vmem:[%s1625 + $0x8] sm:$0xf]
        %v1629 = vld [vmem:[%s1625 + $0xc] sm:$0xf]
        %s1630 = scalar_lea.vmem %s2, 416
        %v1631 = vld [vmem:[%s1630] sm:$0xf]
        %v1632 = vld [vmem:[%s1630 + $0x4] sm:$0xf]
        %v1633 = vld [vmem:[%s1630 + $0x8] sm:$0xf]
        %v1634 = vld [vmem:[%s1630 + $0xc] sm:$0xf]
        %s1635 = scalar_lea.vmem %s2, 432
        %v1636 = vld [vmem:[%s1635] sm:$0xf]
        %v1637 = vld [vmem:[%s1635 + $0x4] sm:$0xf]
        %v1638 = vld [vmem:[%s1635 + $0x8] sm:$0xf]
        %v1639 = vld [vmem:[%s1635 + $0xc] sm:$0xf]
        %s1640 = scalar_lea.vmem %s1, 21
        %v1641 = vld [vmem:[%s1640] sm:$0x1]
        %s1642 = scalar_lea.vmem %s1, 22
        %v1643 = vld [vmem:[%s1642] sm:$0x1]
        %s1644 = scalar_lea.vmem %s2, 448
        %v1645 = vld [vmem:[%s1644] sm:$0xf]
        %v1646 = vld [vmem:[%s1644 + $0x4] sm:$0xf]
        %v1647 = vld [vmem:[%s1644 + $0x8] sm:$0xf]
        %v1648 = vld [vmem:[%s1644 + $0xc] sm:$0xf]
        %s1649 = scalar_lea.vmem %s2, 464
        %v1650 = vld [vmem:[%s1649] sm:$0xf]
        %v1651 = vld [vmem:[%s1649 + $0x4] sm:$0xf]
        %v1652 = vld [vmem:[%s1649 + $0x8] sm:$0xf]
        %v1653 = vld [vmem:[%s1649 + $0xc] sm:$0xf]
        %s1654 = scalar_lea.vmem %s2, 480
        %v1655 = vld [vmem:[%s1654] sm:$0xf]
        %v1656 = vld [vmem:[%s1654 + $0x4] sm:$0xf]
        %v1657 = vld [vmem:[%s1654 + $0x8] sm:$0xf]
        %v1658 = vld [vmem:[%s1654 + $0xc] sm:$0xf]
        %s1659 = scalar_lea.vmem %s2, 496
        %v1660 = vld [vmem:[%s1659] sm:$0xf]
        %v1661 = vld [vmem:[%s1659 + $0x4] sm:$0xf]
        %v1662 = vld [vmem:[%s1659 + $0x8] sm:$0xf]
        %v1663 = vld [vmem:[%s1659 + $0xc] sm:$0xf]
        %s1664 = scalar_lea.vmem %s1, 23
        %v1665 = vld [vmem:[%s1664] sm:$0x1]
        %s1666 = scalar_lea.vmem %s2, 512
        %v1667 = vld [vmem:[%s1666] sm:$0xf]
        %v1668 = vld [vmem:[%s1666 + $0x4] sm:$0xf]
        %v1669 = vld [vmem:[%s1666 + $0x8] sm:$0xf]
        %v1670 = vld [vmem:[%s1666 + $0xc] sm:$0xf]
        %s1671 = scalar_lea.vmem %s1, 24
        %v1672 = vld [vmem:[%s1671] sm:$0x1]
        %s1673 = scalar_lea.vmem %s2, 528
        %v1674 = vld [vmem:[%s1673] sm:$0xf]
        %v1675 = vld [vmem:[%s1673 + $0x4] sm:$0xf]
        %v1676 = vld [vmem:[%s1673 + $0x8] sm:$0xf]
        %v1677 = vld [vmem:[%s1673 + $0xc] sm:$0xf]
        %s1678 = scalar_lea.vmem %s1, 25
        %v1679 = vld [vmem:[%s1678] sm:$0x1]
        %v1680 = vsel %vm1262, %v722, 0
        %1682 = vmatpush.msra.mxu0 0.0
        %1683 = vmatpush.msra.mxu0 0.0
        %1684 = vmatpush.msra.mxu0 0.0
        %1685 = vmatpush.msra.mxu0 0.0
        %1686 = vmatpush.msra.mxu0 0.0
        %1687 = vmatpush.msra.mxu0 0.0
        %1688 = vmatpush.msra.mxu0 0.0
        %1689 = vmatpush.msra.mxu0 0.0
        %1690 = vmatpush.msra.mxu0 0.0
        %1691 = vmatpush.msra.mxu0 0.0
        %1692 = vmatpush.msra.mxu0 0.0
        %1693 = vmatpush.msra.mxu0 0.0
        %1694 = vmatpush.msra.mxu0 0.0
        %1695 = vmatpush.msra.mxu0 0.0
        %1696 = vmatpush.msra.mxu0 0.0
        %1697 = vmatpush.msra.mxu0 %v1620
        %1698 = vmatmul.f32.gmra.mxu0 %v1680
        %v1699 = vpop.f32.mrf.mxu0
        %v1700 = vadd.f32 0.0, %v1699
        %1701 = vdwg.mxu0
        %v1702 = vpack.c.bf16 %v1700, %v1700
        %v1704 = vperm.slane %v1679, 0
        %v1710 = vunpack.c.l.b16 %v1674
        %v1711 = vunpack.c.l.b16 %v1675
        %v1712 = vunpack.c.l.b16 %v1676
        %v1713 = vunpack.c.l.b16 %v1677
        %v1714 = vpack.c.b16 %v1711, %v1710
        %v1715 = vpack.c.b16 %v1713, %v1712
        %v1719 = vsel %vm290, %v1702, 0
        %1721 = vmatpush.bf16.msra.mxu0 0
        %1722 = vmatpush.bf16.msra.mxu0 0
        %1723 = vmatpush.bf16.msra.mxu0 0
        %1724 = vmatpush.bf16.msra.mxu0 0
        %1725 = vmatpush.bf16.msra.mxu0 0
        %1726 = vmatpush.bf16.msra.mxu0 0
        %1727 = vmatpush.bf16.msra.mxu0 %v1715
        %1728 = vmatpush.bf16.msra.mxu0 %v1714
        %1729 = vmatmul.bf16.gmra.mxu0 %v1719
        %v1730 = vpop.f32.mrf.mxu0
        %v1731 = vadd.f32 %v1704, %v1730
        %v1732 = vpop.f32.mrf.mxu0
        %1733 = vdwg.mxu0
        %v1735 = vperm.slane %v1622, 0
        %v1737 = vmul.f32 %v1620, %v1735
        %v1739 = vperm.slane %v1624, 0
        %v1741 = vadd.f32 %v1737, %v1739
        %v1742 = vmax.f32 %v1741, 0.0
        %1743 = vmatpush.msra.mxu0 0.0
        %1744 = vmatpush.msra.mxu0 0.0
        %1745 = vmatpush.msra.mxu0 0.0
        %1746 = vmatpush.msra.mxu0 0.0
        %1747 = vmatpush.msra.mxu0 0.0
        %1748 = vmatpush.msra.mxu0 0.0
        %1749 = vmatpush.msra.mxu0 0.0
        %1750 = vmatpush.msra.mxu0 0.0
        %1751 = vmatpush.msra.mxu0 0.0
        %1752 = vmatpush.msra.mxu0 0.0
        %1753 = vmatpush.msra.mxu0 0.0
        %1754 = vmatpush.msra.mxu0 0.0
        %1755 = vmatpush.msra.mxu0 0.0
        %1756 = vmatpush.msra.mxu0 0.0
        %1757 = vmatpush.msra.mxu0 0.0
        %1758 = vmatpush.msra.mxu0 %v1742
        %1759 = vmatmul.f32.gmra.mxu0 %v1263
        %v1760 = vpop.f32.mrf.mxu0
        %v1761 = vadd.f32 0.0, %v1760
        %1762 = vdwg.mxu0
        %v1763 = vpack.c.bf16 %v1761, %v1761
        %v1764 = vpack.c.bf16 %v1742, %v1742
        %v1769 = vunpack.c.l.b16 %v1631
        %v1770 = vunpack.c.l.b16 %v1632
        %v1771 = vunpack.c.l.b16 %v1633
        %v1772 = vunpack.c.l.b16 %v1634
        %v1773 = vpack.c.b16 %v1770, %v1769
        %v1774 = vpack.c.b16 %v1772, %v1771
        %v1778 = vsel %vm290, %v1764, 0
        %1780 = vmatpush.bf16.msra.mxu0 0
        %1781 = vmatpush.bf16.msra.mxu0 0
        %1782 = vmatpush.bf16.msra.mxu0 0
        %1783 = vmatpush.bf16.msra.mxu0 0
        %1784 = vmatpush.bf16.msra.mxu0 0
        %1785 = vmatpush.bf16.msra.mxu0 0
        %1786 = vmatpush.bf16.msra.mxu0 %v1774
        %1787 = vmatpush.bf16.msra.mxu0 %v1773
        %1788 = vmatmul.bf16.gmra.mxu0 %v1778
        %v1789 = vpop.f32.mrf.mxu0
        %v1790 = vadd.f32 0.0, %v1789
        %v1791 = vpop.f32.mrf.mxu0
        %1792 = vdwg.mxu0
        %v1797 = vunpack.c.l.b16 %v1626
        %v1798 = vunpack.c.l.b16 %v1627
        %v1799 = vunpack.c.l.b16 %v1628
        %v1800 = vunpack.c.l.b16 %v1629
        %v1801 = vpack.c.b16 %v1798, %v1797
        %v1802 = vpack.c.b16 %v1800, %v1799
        %v1806 = vsel %vm290, %v1763, 0
        %1808 = vmatpush.bf16.msra.mxu0 0
        %1809 = vmatpush.bf16.msra.mxu0 0
        %1810 = vmatpush.bf16.msra.mxu0 0
        %1811 = vmatpush.bf16.msra.mxu0 0
        %1812 = vmatpush.bf16.msra.mxu0 0
        %1813 = vmatpush.bf16.msra.mxu0 0
        %1814 = vmatpush.bf16.msra.mxu0 %v1802
        %1815 = vmatpush.bf16.msra.mxu0 %v1801
        %1816 = vmatmul.bf16.gmra.mxu0 %v1806
        %v1817 = vpop.f32.mrf.mxu0
        %v1818 = vadd.f32 %v1790, %v1817
        %v1819 = vpop.f32.mrf.mxu0
        %1820 = vdwg.mxu0
        %1821 = vmatpush.msra.mxu0 0.0
        %1822 = vmatpush.msra.mxu0 0.0
        %1823 = vmatpush.msra.mxu0 0.0
        %1824 = vmatpush.msra.mxu0 0.0
        %1825 = vmatpush.msra.mxu0 0.0
        %1826 = vmatpush.msra.mxu0 0.0
        %1827 = vmatpush.msra.mxu0 0.0
        %1828 = vmatpush.msra.mxu0 0.0
        %1829 = vmatpush.msra.mxu0 0.0
        %1830 = vmatpush.msra.mxu0 0.0
        %1831 = vmatpush.msra.mxu0 0.0
        %1832 = vmatpush.msra.mxu0 0.0
        %1833 = vmatpush.msra.mxu0 0.0
        %1834 = vmatpush.msra.mxu0 0.0
        %1835 = vmatpush.msra.mxu0 0.0
        %1836 = vmatpush.msra.mxu0 %v1742
        %1837 = vmatmul.f32.gmra.mxu0 %v1343
        %v1838 = vpop.f32.mrf.mxu0
        %v1839 = vadd.f32 0.0, %v1838
        %1840 = vdwg.mxu0
        %v1841 = vpack.c.bf16 %v1839, %v1839
        %v1846 = vunpack.c.l.b16 %v1636
        %v1847 = vunpack.c.l.b16 %v1637
        %v1848 = vunpack.c.l.b16 %v1638
        %v1849 = vunpack.c.l.b16 %v1639
        %v1850 = vpack.c.b16 %v1847, %v1846
        %v1851 = vpack.c.b16 %v1849, %v1848
        %v1855 = vsel %vm290, %v1841, 0
        %1857 = vmatpush.bf16.msra.mxu0 0
        %1858 = vmatpush.bf16.msra.mxu0 0
        %1859 = vmatpush.bf16.msra.mxu0 0
        %1860 = vmatpush.bf16.msra.mxu0 0
        %1861 = vmatpush.bf16.msra.mxu0 0
        %1862 = vmatpush.bf16.msra.mxu0 0
        %1863 = vmatpush.bf16.msra.mxu0 %v1851
        %1864 = vmatpush.bf16.msra.mxu0 %v1850
        %1865 = vmatmul.bf16.gmra.mxu0 %v1855
        %v1866 = vpop.f32.mrf.mxu0
        %v1867 = vadd.f32 0.0, %v1866
        %v1868 = vpop.f32.mrf.mxu0
        %1869 = vdwg.mxu0
        %v1870 = vadd.f32 %v1818, %v1867
        %v1872 = vperm.slane %v1641, 0
        %v1874 = vmul.f32 %v1870, %v1872
        %v1876 = vperm.slane %v1643, 0
        %v1878 = vadd.f32 %v1874, %v1876
        %v1879 = vmax.f32 %v1878, 0.0
        %v1880 = vsel %vm1262, %v943, 0
        %1882 = vmatpush.msra.mxu0 0.0
        %1883 = vmatpush.msra.mxu0 0.0
        %1884 = vmatpush.msra.mxu0 0.0
        %1885 = vmatpush.msra.mxu0 0.0
        %1886 = vmatpush.msra.mxu0 0.0
        %1887 = vmatpush.msra.mxu0 0.0
        %1888 = vmatpush.msra.mxu0 0.0
        %1889 = vmatpush.msra.mxu0 0.0
        %1890 = vmatpush.msra.mxu0 0.0
        %1891 = vmatpush.msra.mxu0 0.0
        %1892 = vmatpush.msra.mxu0 0.0
        %1893 = vmatpush.msra.mxu0 0.0
        %1894 = vmatpush.msra.mxu0 0.0
        %1895 = vmatpush.msra.mxu0 0.0
        %1896 = vmatpush.msra.mxu0 0.0
        %1897 = vmatpush.msra.mxu0 %v1879
        %1898 = vmatmul.f32.gmra.mxu0 %v1880
        %v1899 = vpop.f32.mrf.mxu0
        %v1900 = vadd.f32 0.0, %v1899
        %1901 = vdwg.mxu0
        %v1902 = vpack.c.bf16 %v1900, %v1900
        %v1903 = vsel %vm1262, %v969, 0
        %1905 = vmatpush.msra.mxu0 0.0
        %1906 = vmatpush.msra.mxu0 0.0
        %1907 = vmatpush.msra.mxu0 0.0
        %1908 = vmatpush.msra.mxu0 0.0
        %1909 = vmatpush.msra.mxu0 0.0
        %1910 = vmatpush.msra.mxu0 0.0
        %1911 = vmatpush.msra.mxu0 0.0
        %1912 = vmatpush.msra.mxu0 0.0
        %1913 = vmatpush.msra.mxu0 0.0
        %1914 = vmatpush.msra.mxu0 0.0
        %1915 = vmatpush.msra.mxu0 0.0
        %1916 = vmatpush.msra.mxu0 0.0
        %1917 = vmatpush.msra.mxu0 0.0
        %1918 = vmatpush.msra.mxu0 0.0
        %1919 = vmatpush.msra.mxu0 0.0
        %1920 = vmatpush.msra.mxu0 %v1879
        %1921 = vmatmul.f32.gmra.mxu0 %v1903
        %v1922 = vpop.f32.mrf.mxu0
        %v1923 = vadd.f32 0.0, %v1922
        %1924 = vdwg.mxu0
        %v1925 = vpack.c.bf16 %v1923, %v1923
        %v1930 = vunpack.c.l.b16 %v1650
        %v1931 = vunpack.c.l.b16 %v1651
        %v1932 = vunpack.c.l.b16 %v1652
        %v1933 = vunpack.c.l.b16 %v1653
        %v1934 = vpack.c.b16 %v1931, %v1930
        %v1935 = vpack.c.b16 %v1933, %v1932
        %v1939 = vsel %vm290, %v1925, 0
        %1941 = vmatpush.bf16.msra.mxu0 0
        %1942 = vmatpush.bf16.msra.mxu0 0
        %1943 = vmatpush.bf16.msra.mxu0 0
        %1944 = vmatpush.bf16.msra.mxu0 0
        %1945 = vmatpush.bf16.msra.mxu0 0
        %1946 = vmatpush.bf16.msra.mxu0 0
        %1947 = vmatpush.bf16.msra.mxu0 %v1935
        %1948 = vmatpush.bf16.msra.mxu0 %v1934
        %1949 = vmatmul.bf16.gmra.mxu0 %v1939
        %v1950 = vpop.f32.mrf.mxu0
        %v1951 = vadd.f32 0.0, %v1950
        %v1952 = vpop.f32.mrf.mxu0
        %1953 = vdwg.mxu0
        %v1958 = vunpack.c.l.b16 %v1645
        %v1959 = vunpack.c.l.b16 %v1646
        %v1960 = vunpack.c.l.b16 %v1647
        %v1961 = vunpack.c.l.b16 %v1648
        %v1962 = vpack.c.b16 %v1959, %v1958
        %v1963 = vpack.c.b16 %v1961, %v1960
        %v1967 = vsel %vm290, %v1902, 0
        %1969 = vmatpush.bf16.msra.mxu0 0
        %1970 = vmatpush.bf16.msra.mxu0 0
        %1971 = vmatpush.bf16.msra.mxu0 0
        %1972 = vmatpush.bf16.msra.mxu0 0
        %1973 = vmatpush.bf16.msra.mxu0 0
        %1974 = vmatpush.bf16.msra.mxu0 0
        %1975 = vmatpush.bf16.msra.mxu0 %v1963
        %1976 = vmatpush.bf16.msra.mxu0 %v1962
        %1977 = vmatmul.bf16.gmra.mxu0 %v1967
        %v1978 = vpop.f32.mrf.mxu0
        %v1979 = vadd.f32 %v1951, %v1978
        %v1980 = vpop.f32.mrf.mxu0
        %1981 = vdwg.mxu0
        %v1982 = vsel %vm1262, %v1051, 0
        %1984 = vmatpush.msra.mxu0 0.0
        %1985 = vmatpush.msra.mxu0 0.0
        %1986 = vmatpush.msra.mxu0 0.0
        %1987 = vmatpush.msra.mxu0 0.0
        %1988 = vmatpush.msra.mxu0 0.0
        %1989 = vmatpush.msra.mxu0 0.0
        %1990 = vmatpush.msra.mxu0 0.0
        %1991 = vmatpush.msra.mxu0 0.0
        %1992 = vmatpush.msra.mxu0 0.0
        %1993 = vmatpush.msra.mxu0 0.0
        %1994 = vmatpush.msra.mxu0 0.0
        %1995 = vmatpush.msra.mxu0 0.0
        %1996 = vmatpush.msra.mxu0 0.0
        %1997 = vmatpush.msra.mxu0 0.0
        %1998 = vmatpush.msra.mxu0 0.0
        %1999 = vmatpush.msra.mxu0 %v1879
        %2000 = vmatmul.f32.gmra.mxu0 %v1982
        %v2001 = vpop.f32.mrf.mxu0
        %v2002 = vadd.f32 0.0, %v2001
        %2003 = vdwg.mxu0
        %v2004 = vpack.c.bf16 %v2002, %v2002
        %v2009 = vunpack.c.l.b16 %v1655
        %v2010 = vunpack.c.l.b16 %v1656
        %v2011 = vunpack.c.l.b16 %v1657
        %v2012 = vunpack.c.l.b16 %v1658
        %v2013 = vpack.c.b16 %v2010, %v2009
        %v2014 = vpack.c.b16 %v2012, %v2011
        %v2018 = vsel %vm290, %v2004, 0
        %2020 = vmatpush.bf16.msra.mxu0 0
        %2021 = vmatpush.bf16.msra.mxu0 0
        %2022 = vmatpush.bf16.msra.mxu0 0
        %2023 = vmatpush.bf16.msra.mxu0 0
        %2024 = vmatpush.bf16.msra.mxu0 0
        %2025 = vmatpush.bf16.msra.mxu0 0
        %2026 = vmatpush.bf16.msra.mxu0 %v2014
        %2027 = vmatpush.bf16.msra.mxu0 %v2013
        %2028 = vmatmul.bf16.gmra.mxu0 %v2018
        %v2029 = vpop.f32.mrf.mxu0
        %v2030 = vadd.f32 0.0, %v2029
        %v2031 = vpop.f32.mrf.mxu0
        %2032 = vdwg.mxu0
        %v2033 = vadd.f32 %v1979, %v2030
        %vm2034 = vcmask 257024
        %v2035 = vsel %vm2034, %v2033, 0.0
        %v2036 = vrot.slane %v2035, 4
        %v2037 = vadd.f32 %v2035, %v2036
        %v2038 = vrot.slane %v2037, 2
        %v2039 = vadd.f32 %v2037, %v2038
        %v2040 = vrot.slane %v2039, 1
        %v2041 = vadd.f32 %v2039, %v2040
        %v2042 = vrcp.pop 4.0
        %v2043 = vmul.f32 4.0, %v2042
        %v2044 = vsub.f32 1.0, %v2043
        %v2045 = vmul.f32 %v2042, %v2044
        %v2046 = vadd.f32 %v2042, %v2045
        %vm2047 = vweird.f32 %v2042
        %v2048 = vsel %vm2047, %v2042, %v2046
        %v2049 = vmul.f32 %v2041, %v2048
        %v2050 = vpack.c.bf16 %v2049, %v2049
        %v2055 = vunpack.c.l.b16 %v1660
        %v2056 = vunpack.c.l.b16 %v1661
        %v2057 = vunpack.c.l.b16 %v1662
        %v2058 = vunpack.c.l.b16 %v1663
        %v2059 = vpack.c.b16 %v2056, %v2055
        %v2060 = vpack.c.b16 %v2058, %v2057
        %v2064 = vsel %vm290, %v2050, 0
        %2066 = vmatpush.bf16.msra.mxu0 0
        %2067 = vmatpush.bf16.msra.mxu0 0
        %2068 = vmatpush.bf16.msra.mxu0 0
        %2069 = vmatpush.bf16.msra.mxu0 0
        %2070 = vmatpush.bf16.msra.mxu0 0
        %2071 = vmatpush.bf16.msra.mxu0 0
        %2072 = vmatpush.bf16.msra.mxu0 %v2060
        %2073 = vmatpush.bf16.msra.mxu0 %v2059
        %2074 = vmatmul.bf16.gmra.mxu0 %v2064
        %v2075 = vpop.f32.mrf.mxu0
        %v2076 = vadd.f32 %v1665, %v2075
        %v2077 = vpop.f32.mrf.mxu0
        %2078 = vdwg.mxu0
        %v2079 = vmax.f32 %v2076, 0.0
        %v2080 = vpack.c.bf16 %v2079, %v2079
        %v2085 = vunpack.c.l.b16 %v1667
        %v2086 = vunpack.c.l.b16 %v1668
        %v2087 = vunpack.c.l.b16 %v1669
        %v2088 = vunpack.c.l.b16 %v1670
        %v2089 = vpack.c.b16 %v2086, %v2085
        %v2090 = vpack.c.b16 %v2088, %v2087
        %v2094 = vsel %vm290, %v2080, 0
        %2096 = vmatpush.bf16.msra.mxu0 0
        %2097 = vmatpush.bf16.msra.mxu0 0
        %2098 = vmatpush.bf16.msra.mxu0 0
        %2099 = vmatpush.bf16.msra.mxu0 0
        %2100 = vmatpush.bf16.msra.mxu0 0
        %2101 = vmatpush.bf16.msra.mxu0 0
        %2102 = vmatpush.bf16.msra.mxu0 %v2090
        %2103 = vmatpush.bf16.msra.mxu0 %v2089
        %2104 = vmatmul.bf16.gmra.mxu0 %v2094
        %v2105 = vpop.f32.mrf.mxu0
        %v2106 = vadd.f32 %v1672, %v2105
        %v2107 = vpop.f32.mrf.mxu0
        %2108 = vdwg.mxu0
        %v2109 = vsub.f32 0.0, %v2106
        %v2110 = vmul.f32 %v2109, 1.442695
        %v2111 = vpow.pop %v2110
        %v2112 = vadd.f32 %v2111, 1.0
        %v2113 = vrcp.pop %v2112
        %v2114 = vmul.f32 %v2112, %v2113
        %v2115 = vsub.f32 1.0, %v2114
        %v2116 = vmul.f32 %v2113, %v2115
        %v2117 = vadd.f32 %v2113, %v2116
        %vm2118 = vweird.f32 %v2112
        %vm2119 = vweird.f32 %v2113
        %vm2120 = vmor %vm2118, %vm2119
        %v2121 = vsel %vm2120, %v2113, %v2117
        %v2122 = vand.u32 2147483647, %v2112
        %vm2123 = vcmp.eq.f32.partialorder %v2122, 8.507059e+37
        %v2124 = vand.u32 %v2112, 2147483648
        %v2125 = vor.u32 1.1754944e-38, %v2124
        %v2126 = vsel %vm2123, %v2125, %v2121
        %v2127 = vmul.f32 1.0, %v2126
        %v2128 = vperm.slane %v2127, 0
        %v2129 = vmul.f32 %v2033, %v2128
        %v2130 = vadd.f32 %v2129, %v1731
        %vm2131 = vcmask 257027
        %2132 = vst.msk [vmem:[%s162 - $0x3] sm:$0x8] %vm2131, %v2130
        %s2133 = sand.u32 %s93, 1
        %s2134 = scalar_lea.sflag [#allocation3], %s2133
        %s2135 = sand.u32 %s93, 1
        %s2136 = scalar_lea.vmem [#allocation2], %s2135
        // Predicated region
        $region33: #{h_agent_temporal_encoder.1} parent=31 // pred_check
          %p2137 = pneg %p103
        $region34: #{h_agent_temporal_encoder.1} parent=31 // pred_check_branch
          %2139 = sbr.rel (%p2137) target = $region36
        $region35: #{h_agent_temporal_encoder.1} parent=31 // pred_region
          %2141 = vsyncadd %s2134, 0
          %s2142 = scalar_lea.hbm %s3, %s17
          %s2144 = sshll.u32 %s2136, 4
          %s2145 = int_to_ptr.vmem [resolvable:$true] %s2144
          %s2146 = sshll.u32 %s2142, 4
          %s2147 = int_to_ptr.hbm [resolvable:$true] %s2146
          %2149 = dma.vmem_to_hbm [thread:$0]  %s2145, 16, %s2147, %s2134
        $region36: #{h_agent_temporal_encoder.1} parent=31 // pred_fallthru
          _
      $region32: #{h_agent_temporal_encoder.1} parent=5 // pred_fallthru
        _
      %p2150 = scmp.le.s32.totalorder 2, %s12
      // Predicated region
      $region37: #{h_agent_temporal_encoder.1} parent=5 // pred_check
        %p2151 = pneg %p2150
      $region38: #{h_agent_temporal_encoder.1} parent=5 // pred_check_branch
        %2153 = sbr.rel (%p2151) target = $region40
      $region39: #{h_agent_temporal_encoder.1} parent=5 // pred_region
        %s2154 = ssub.s32 %s12, 2
        // Predicated region
        $region41: #{h_agent_temporal_encoder.1} parent=39 // pred_check
          %p2155 = pneg %p109
        $region42: #{h_agent_temporal_encoder.1} parent=39 // pred_check_branch
          %2157 = sbr.rel (%p2155) target = $region44
        $region43: #{h_agent_temporal_encoder.1} parent=39 // pred_region
          %s2158 = sand.u32 %s94, 1
          %s2159 = scalar_lea.sflag [#allocation3], %s2158
          %s2160 = sand.u32 %s94, 1
          %s2161 = scalar_lea.vmem [#allocation2], %s2160
          %2163 = dma.done %s2159, 16
        $region44: #{h_agent_temporal_encoder.1} parent=39 // pred_fallthru
          _
      $region40: #{h_agent_temporal_encoder.1} parent=5 // pred_fallthru
        _
    $region6: #{h_agent_temporal_encoder.1} parent=1 // loop_footer
      %s16 = sadd.s32 1, %s12
    $region7: #{h_agent_temporal_encoder.1} parent=1 // loop_footer_branch
      %11 = sbr.rel target = $region3
    $region8: #{h_agent_temporal_encoder.1} parent=1 // loop_exit
      _
    %2164 = vsyncpa [#allocation3], 1
    %s2165 = scalar_lea.sflag [#allocation3], 1
    %2166 = vsyncpa %s2165, 1

</llo_original>
